<compile_context>
chip_gen: v6e
topology: v6e:2x2x1
jax: 0.10.0
libtpu: 0.0.40
codegen_flags: <defaults>
</compile_context>

<pallas_src>
import jax
import jax.numpy as jnp
import numpy as np
from jax.experimental import pallas as pl
from jax.experimental.pallas import tpu as pltpu

_LANE = 128
_SUBLANE = 8
_TB_CAP = 512          # per-tile row cap (keeps per-core footprint small on v7x)


def _round_up(n, m):
    return ((n + m - 1) // m) * m


# ---------------------------------------------------------------------------
# Host-side (one-time) weight folding: conv -> lane-dense GEMM matrices
# ---------------------------------------------------------------------------
def _conv_to_dense(w_hwio, H, W, stride=2):
    """Fold a KHxKW / stride-2 / VALID conv into a dense (H*W*Cin, Ho*Wo*Cout)
    matrix acting on NHWC-flattened activations (row index = (h*W + w)*Cin + c)."""
    w = np.asarray(w_hwio, np.float32)
    KH, KW, Cin, Cout = w.shape
    Ho = (H - KH) // stride + 1
    Wo = (W - KW) // stride + 1
    dense = np.zeros((H * W * Cin, Ho * Wo * Cout), np.float32)
    for i in range(Ho):
        for j in range(Wo):
            c0 = (i * Wo + j) * Cout
            for kh in range(KH):
                for kw in range(KW):
                    r0 = ((stride * i + kh) * W + (stride * j + kw)) * Cin
                    dense[r0:r0 + Cin, c0:c0 + Cout] = w[kh, kw]
    return dense, Ho, Wo


def _pad2(a, rows, cols):
    out = np.zeros((rows, cols), np.float32)
    a = np.asarray(a, np.float32)
    out[:a.shape[0], :a.shape[1]] = a
    return out


def fold_params(params, H=16, W=16):
    """Build padded, lane-dense GEMM weights for the fused kernel (host, once).

    Weights are stored in bf16 (MXU inputs); biases stay f32 (f32 epilogue)."""
    w1d, H1, W1 = _conv_to_dense(params["w1"], H, W)
    w2d, H2, W2 = _conv_to_dense(params["w2"], H1, W1)
    w3d, H3, W3 = _conv_to_dense(params["w3"], H2, W2)
    P1, P2, P3 = H1 * W1, H2 * W2, H3 * W3

    b1d = np.tile(np.asarray(params["b1"], np.float32), P1)
    b2d = np.tile(np.asarray(params["b2"], np.float32), P2)
    b3d = np.tile(np.asarray(params["b3"], np.float32), P3)

    # Global average pool folded into the fc weight (1/P3 pre-scaled, tiled over space).
    wfc = np.asarray(params["wfc"], np.float32)            # (16, num_classes)
    bfc = np.asarray(params["bfc"], np.float32)
    wfcd = np.tile(wfc, (P3, 1)) / float(P3)               # (P3*16, num_classes)

    K0p = _round_up(w1d.shape[0], _LANE)
    N1p = _round_up(w1d.shape[1], _LANE)
    N2p = _round_up(w2d.shape[1], _LANE)
    N3p = _round_up(w3d.shape[1], _LANE)
    N4p = _round_up(wfc.shape[1], _LANE)

    folded = {
        "w1": jnp.asarray(_pad2(w1d, K0p, N1p), jnp.bfloat16),
        "b1": jnp.asarray(_pad2(b1d[None, :], 1, N1p), jnp.float32),
        "w2": jnp.asarray(_pad2(w2d, N1p, N2p), jnp.bfloat16),
        "b2": jnp.asarray(_pad2(b2d[None, :], 1, N2p), jnp.float32),
        "w3": jnp.asarray(_pad2(w3d, N2p, N3p), jnp.bfloat16),
        "b3": jnp.asarray(_pad2(b3d[None, :], 1, N3p), jnp.float32),
        "wfc": jnp.asarray(_pad2(wfcd, N3p, N4p), jnp.bfloat16),
        "bfc": jnp.asarray(_pad2(bfc[None, :], 1, N4p), jnp.float32),
    }
    return folded


# ---------------------------------------------------------------------------
# Fused Pallas kernel: conv1->conv2->conv3 (+bias+ReLU) -> pooled fc, all in VMEM
# bf16 MXU inputs, f32 accumulate, f32 bias/ReLU epilogue.
# ---------------------------------------------------------------------------
def _fused_cnn_kernel(x_ref, w1_ref, b1_ref, w2_ref, b2_ref, w3_ref, b3_ref,
                      wfc_ref, bfc_ref, o_ref):
    # conv1 + ReLU  (folded GEMM: K=256, N=896-padded)
    a = jnp.dot(x_ref[...].astype(jnp.bfloat16), w1_ref[...],
                preferred_element_type=jnp.float32)
    a = jnp.maximum(a + b1_ref[...], 0.0)
    # conv2 + ReLU  (K=896, N=256-padded)
    a = jnp.dot(a.astype(jnp.bfloat16), w2_ref[...],
                preferred_element_type=jnp.float32)
    a = jnp.maximum(a + b2_ref[...], 0.0)
    # conv3 + ReLU  (K=256, N=128-padded)
    a = jnp.dot(a.astype(jnp.bfloat16), w3_ref[...],
                preferred_element_type=jnp.float32)
    a = jnp.maximum(a + b3_ref[...], 0.0)
    # global-avg-pool (folded into wfc) + fc; lane-dense padded logits
    o_ref[...] = jnp.dot(a.astype(jnp.bfloat16), wfc_ref[...],
                         preferred_element_type=jnp.float32) + bfc_ref[...]


def _pick_batch_tile(B):
    """Balanced, sublane-aligned batch tiles; >=2 grid steps when possible (megacore)."""
    n_tiles = max(pl.cdiv(B, _TB_CAP), 1)
    if n_tiles == 1 and B > _SUBLANE:
        n_tiles = 2                       # let both v7x TensorCores work
    TB = _round_up(pl.cdiv(B, n_tiles), _SUBLANE)
    Bp = TB * n_tiles
    return TB, Bp, n_tiles


def simple_cnn_forward(x_nchw, folded, num_classes=10):
    """Forward pass matching SimpleCNN.forward; x is NCHW, returns (B, num_classes)."""
    B, Cin, H, W = x_nchw.shape
    K0 = H * W * Cin
    K0p = folded["w1"].shape[0]
    N4p = folded["bfc"].shape[1]

    # NCHW -> NHWC -> flatten to (B, H*W*Cin); pad batch to balanced tiles and lanes
    # to the folded-weight contraction depth (zeros are benign).
    x = jnp.transpose(x_nchw, (0, 2, 3, 1)).reshape(B, K0)
    TB, Bp, n_tiles = _pick_batch_tile(B)
    x = jnp.pad(x, ((0, Bp - B), (0, K0p - K0)))

    def _full(arr):
        # Grid-invariant weights/biases: constant index_map -> DMA'd once; single-buffer
        # them so the pipeline does not reserve 2x their VMEM.
        r, c = arr.shape
        return pl.BlockSpec((r, c), lambda i: (0, 0), pipeline_mode=pl.Buffered(1))

    out = pl.pallas_call(
        _fused_cnn_kernel,
        out_shape=jax.ShapeDtypeStruct((Bp, N4p), jnp.float32),
        grid=(n_tiles,),
        in_specs=[
            pl.BlockSpec((TB, K0p), lambda i: (i, 0)),   # activations: tiled over batch
            _full(folded["w1"]), _full(folded["b1"]),
            _full(folded["w2"]), _full(folded["b2"]),
            _full(folded["w3"]), _full(folded["b3"]),
            _full(folded["wfc"]), _full(folded["bfc"]),
        ],
        out_specs=pl.BlockSpec((TB, N4p), lambda i: (i, 0)),
        compiler_params=pltpu.CompilerParams(
            dimension_semantics=("parallel",),
            vmem_limit_bytes=32 * 1024 * 1024),
    )(x, folded["w1"], folded["b1"], folded["w2"], folded["b2"],
      folded["w3"], folded["b3"], folded["wfc"], folded["bfc"])
    return out[:B, :num_classes]


# ---------------------------------------------------------------------------
# Deterministic parameter init (synthetic; shapes from SimpleCNN.__init__)
# ---------------------------------------------------------------------------
def init_params(key):
    ks = jax.random.split(key, 8)

    def w(k, shape, scale=0.1):
        return (scale * jax.random.normal(k, shape)).astype(jnp.float32)

    return {
        # conv weights stored as HWIO = (kh, kw, in_c, out_c)
        "w1": w(ks[0], (3, 3, 1, 16)),
        "b1": w(ks[1], (16,), 0.01),
        "w2": w(ks[2], (3, 3, 16, 16)),
        "b2": w(ks[3], (16,), 0.01),
        "w3": w(ks[4], (3, 3, 16, 16)),
        "b3": w(ks[5], (16,), 0.01),
        # fc stored as (in_features, out_features) = (16, 10)
        "wfc": w(ks[6], (16, 10)),
        "bfc": w(ks[7], (10,), 0.01),
    }


# ---------------------------------------------------------------------------
# NumPy reference (correctness check against the original conv semantics)
# ---------------------------------------------------------------------------
def _conv_ref(x, w, b):
    B, H, W, Cin = x.shape
    KH, KW, _, Cout = w.shape
    Ho = (H - KH) // 2 + 1
    Wo = (W - KW) // 2 + 1
    out = np.zeros((B, Ho, Wo, Cout), np.float32)
    for i in range(Ho):
        for j in range(Wo):
            patch = x[:, 2 * i:2 * i + KH, 2 * j:2 * j + KW, :]
            out[:, i, j, :] = np.tensordot(patch, w, axes=([1, 2, 3], [0, 1, 2]))
    return np.maximum(out + b, 0.0)


def reference_forward(x_nchw, params):
    p = {k: np.asarray(v, np.float32) for k, v in params.items()}
    x = np.transpose(np.asarray(x_nchw, np.float32), (0, 2, 3, 1))
    x = _conv_ref(x, p["w1"], p["b1"])
    x = _conv_ref(x, p["w2"], p["b2"])
    x = _conv_ref(x, p["w3"], p["b3"])
    feat = x.mean(axis=(1, 2))
    return feat @ p["wfc"] + p["bfc"]


if __name__ == "__main__":
    key = jax.random.PRNGKey(0)
    k_x, k_p = jax.random.split(key)

    # Small input consistent with the module: batch=2, 1 channel, 16x16 spatial.
    # 16 -> conv1 -> 7 -> conv2 -> 3 -> conv3 -> 1 -> global avg pool -> fc(16->10)
    x = jax.random.normal(k_x, (2, 1, 16, 16), dtype=jnp.float32)
    params = init_params(k_p)
    folded = fold_params(params, H=16, W=16)   # one-time host-side weight folding

    fwd = jax.jit(simple_cnn_forward, static_argnames=("num_classes",))
    out = jax.block_until_ready(fwd(x, folded, num_classes=10))

    assert out.shape == (2, 10), f"unexpected output shape {out.shape}"
    ref = reference_forward(x, params)
    # bf16 MXU inputs (f32 accumulate) -> relaxed tolerance vs. the f32 reference.
    np.testing.assert_allclose(np.asarray(out), ref, rtol=2e-2, atol=2e-2)

    print("KERNEL_OK")
</pallas_src>

<mosaic_0001>
module attributes {stable_mosaic.version = 11 : i64} {
  func.func @_fused_cnn_kernel(%arg0: i32, %arg1: memref<8x256xf32, #tpu.memory_space<vmem>>, %arg2: memref<256x896xbf16, #tpu.memory_space<vmem>>, %arg3: memref<1x896xf32, #tpu.memory_space<vmem>>, %arg4: memref<896x256xbf16, #tpu.memory_space<vmem>>, %arg5: memref<1x256xf32, #tpu.memory_space<vmem>>, %arg6: memref<256x128xbf16, #tpu.memory_space<vmem>>, %arg7: memref<1x128xf32, #tpu.memory_space<vmem>>, %arg8: memref<128x128xbf16, #tpu.memory_space<vmem>>, %arg9: memref<1x128xf32, #tpu.memory_space<vmem>>, %arg10: memref<8x128xf32, #tpu.memory_space<vmem>>) attributes {dimension_semantics = [#tpu.dimension_semantics<parallel>], iteration_bounds = array<i64: 1>, scalar_prefetch = 0 : i64, scratch_operands = 0 : i64, tpu.core_type = #tpu.core_type<tc>, window_params = [{transform_indices = @transform_0, window_bounds = array<i64: 8, 256>}, {pipeline_mode = #tpu.pipeline_mode<synchronous>, transform_indices = @transform_1, window_bounds = array<i64: 256, 896>}, {pipeline_mode = #tpu.pipeline_mode<synchronous>, transform_indices = @transform_2, window_bounds = array<i64: 1, 896>}, {pipeline_mode = #tpu.pipeline_mode<synchronous>, transform_indices = @transform_3, window_bounds = array<i64: 896, 256>}, {pipeline_mode = #tpu.pipeline_mode<synchronous>, transform_indices = @transform_4, window_bounds = array<i64: 1, 256>}, {pipeline_mode = #tpu.pipeline_mode<synchronous>, transform_indices = @transform_5, window_bounds = array<i64: 256, 128>}, {pipeline_mode = #tpu.pipeline_mode<synchronous>, transform_indices = @transform_6, window_bounds = array<i64: 1, 128>}, {pipeline_mode = #tpu.pipeline_mode<synchronous>, transform_indices = @transform_7, window_bounds = array<i64: 128, 128>}, {pipeline_mode = #tpu.pipeline_mode<synchronous>, transform_indices = @transform_8, window_bounds = array<i64: 1, 128>}, {transform_indices = @transform_9, window_bounds = array<i64: 8, 128>}]} {
    %c0 = arith.constant 0 : index
    %c0_0 = arith.constant 0 : index
    %0 = vector.load %arg1[%c0, %c0_0] : memref<8x256xf32, #tpu.memory_space<vmem>>, vector<8x256xf32>
    %1 = arith.truncf %0 : vector<8x256xf32> to vector<8x256xbf16>
    %c0_1 = arith.constant 0 : index
    %c0_2 = arith.constant 0 : index
    %2 = vector.load %arg2[%c0_1, %c0_2] : memref<256x896xbf16, #tpu.memory_space<vmem>>, vector<256x896xbf16>
    %cst = arith.constant dense<0.000000e+00> : vector<8x896xf32>
    %3 = tpu.matmul %1, %2, %cst {dimension_numbers = #tpu.dot_dimension_numbers<[1], [0], [0], [1], [0, 0, 1, 1], [], []>} : vector<8x256xbf16>, vector<256x896xbf16>, vector<8x896xf32> -> vector<8x896xf32>
    %c0_3 = arith.constant 0 : index
    %c0_4 = arith.constant 0 : index
    %4 = vector.load %arg3[%c0_3, %c0_4] : memref<1x896xf32, #tpu.memory_space<vmem>>, vector<1x896xf32>
    %5 = vector.broadcast %4 : vector<1x896xf32> to vector<8x896xf32>
    %6 = arith.addf %3, %5 : vector<8x896xf32>
    %cst_5 = arith.constant 0.000000e+00 : f32
    %7 = vector.broadcast %cst_5 : f32 to vector<8x896xf32>
    %8 = arith.maximumf %6, %7 : vector<8x896xf32>
    %9 = arith.truncf %8 : vector<8x896xf32> to vector<8x896xbf16>
    %c0_6 = arith.constant 0 : index
    %c0_7 = arith.constant 0 : index
    %10 = vector.load %arg4[%c0_6, %c0_7] : memref<896x256xbf16, #tpu.memory_space<vmem>>, vector<896x256xbf16>
    %cst_8 = arith.constant dense<0.000000e+00> : vector<8x256xf32>
    %11 = tpu.matmul %9, %10, %cst_8 {dimension_numbers = #tpu.dot_dimension_numbers<[1], [0], [0], [1], [0, 0, 1, 1], [], []>} : vector<8x896xbf16>, vector<896x256xbf16>, vector<8x256xf32> -> vector<8x256xf32>
    %c0_9 = arith.constant 0 : index
    %c0_10 = arith.constant 0 : index
    %12 = vector.load %arg5[%c0_9, %c0_10] : memref<1x256xf32, #tpu.memory_space<vmem>>, vector<1x256xf32>
    %13 = vector.broadcast %12 : vector<1x256xf32> to vector<8x256xf32>
    %14 = arith.addf %11, %13 : vector<8x256xf32>
    %cst_11 = arith.constant 0.000000e+00 : f32
    %15 = vector.broadcast %cst_11 : f32 to vector<8x256xf32>
    %16 = arith.maximumf %14, %15 : vector<8x256xf32>
    %17 = arith.truncf %16 : vector<8x256xf32> to vector<8x256xbf16>
    %c0_12 = arith.constant 0 : index
    %c0_13 = arith.constant 0 : index
    %18 = vector.load %arg6[%c0_12, %c0_13] : memref<256x128xbf16, #tpu.memory_space<vmem>>, vector<256x128xbf16>
    %cst_14 = arith.constant dense<0.000000e+00> : vector<8x128xf32>
    %19 = tpu.matmul %17, %18, %cst_14 {dimension_numbers = #tpu.dot_dimension_numbers<[1], [0], [0], [1], [0, 0, 1, 1], [], []>} : vector<8x256xbf16>, vector<256x128xbf16>, vector<8x128xf32> -> vector<8x128xf32>
    %c0_15 = arith.constant 0 : index
    %c0_16 = arith.constant 0 : index
    %20 = vector.load %arg7[%c0_15, %c0_16] : memref<1x128xf32, #tpu.memory_space<vmem>>, vector<1x128xf32>
    %21 = vector.broadcast %20 : vector<1x128xf32> to vector<8x128xf32>
    %22 = arith.addf %19, %21 : vector<8x128xf32>
    %cst_17 = arith.constant 0.000000e+00 : f32
    %23 = vector.broadcast %cst_17 : f32 to vector<8x128xf32>
    %24 = arith.maximumf %22, %23 : vector<8x128xf32>
    %25 = arith.truncf %24 : vector<8x128xf32> to vector<8x128xbf16>
    %c0_18 = arith.constant 0 : index
    %c0_19 = arith.constant 0 : index
    %26 = vector.load %arg8[%c0_18, %c0_19] : memref<128x128xbf16, #tpu.memory_space<vmem>>, vector<128x128xbf16>
    %cst_20 = arith.constant dense<0.000000e+00> : vector<8x128xf32>
    %27 = tpu.matmul %25, %26, %cst_20 {dimension_numbers = #tpu.dot_dimension_numbers<[1], [0], [0], [1], [0, 0, 1, 1], [], []>} : vector<8x128xbf16>, vector<128x128xbf16>, vector<8x128xf32> -> vector<8x128xf32>
    %c0_21 = arith.constant 0 : index
    %c0_22 = arith.constant 0 : index
    %28 = vector.load %arg9[%c0_21, %c0_22] : memref<1x128xf32, #tpu.memory_space<vmem>>, vector<1x128xf32>
    %29 = vector.broadcast %28 : vector<1x128xf32> to vector<8x128xf32>
    %30 = arith.addf %27, %29 : vector<8x128xf32>
    %c0_23 = arith.constant 0 : index
    %c0_24 = arith.constant 0 : index
    %31 = vector.load %arg10[%c0_23, %c0_24] : memref<8x128xf32, #tpu.memory_space<vmem>>, vector<8x128xf32>
    tpu.vector_store %arg10[%c0_23, %c0_24], %30 {strides = array<i32>} : memref<8x128xf32, #tpu.memory_space<vmem>>, vector<8x128xf32>,
    return
  }
  func.func @transform_0(%arg0: i32) -> (i32, i32) {
    %c0_i32 = arith.constant 0 : i32
    %c0_i32_0 = arith.constant 0 : i32
    return %arg0, %c0_i32 : i32, i32
  }
  func.func @transform_1(%arg0: i32) -> (i32, i32) {
    %c0_i32 = arith.constant 0 : i32
    %c0_i32_0 = arith.constant 0 : i32
    %c0_i32_1 = arith.constant 0 : i32
    return %c0_i32, %c0_i32_0 : i32, i32
  }
  func.func @transform_2(%arg0: i32) -> (i32, i32) {
    %c0_i32 = arith.constant 0 : i32
    %c0_i32_0 = arith.constant 0 : i32
    %c0_i32_1 = arith.constant 0 : i32
    return %c0_i32, %c0_i32_0 : i32, i32
  }
  func.func @transform_3(%arg0: i32) -> (i32, i32) {
    %c0_i32 = arith.constant 0 : i32
    %c0_i32_0 = arith.constant 0 : i32
    %c0_i32_1 = arith.constant 0 : i32
    return %c0_i32, %c0_i32_0 : i32, i32
  }
  func.func @transform_4(%arg0: i32) -> (i32, i32) {
    %c0_i32 = arith.constant 0 : i32
    %c0_i32_0 = arith.constant 0 : i32
    %c0_i32_1 = arith.constant 0 : i32
    return %c0_i32, %c0_i32_0 : i32, i32
  }
  func.func @transform_5(%arg0: i32) -> (i32, i32) {
    %c0_i32 = arith.constant 0 : i32
    %c0_i32_0 = arith.constant 0 : i32
    %c0_i32_1 = arith.constant 0 : i32
    return %c0_i32, %c0_i32_0 : i32, i32
  }
  func.func @transform_6(%arg0: i32) -> (i32, i32) {
    %c0_i32 = arith.constant 0 : i32
    %c0_i32_0 = arith.constant 0 : i32
    %c0_i32_1 = arith.constant 0 : i32
    return %c0_i32, %c0_i32_0 : i32, i32
  }
  func.func @transform_7(%arg0: i32) -> (i32, i32) {
    %c0_i32 = arith.constant 0 : i32
    %c0_i32_0 = arith.constant 0 : i32
    %c0_i32_1 = arith.constant 0 : i32
    return %c0_i32, %c0_i32_0 : i32, i32
  }
  func.func @transform_8(%arg0: i32) -> (i32, i32) {
    %c0_i32 = arith.constant 0 : i32
    %c0_i32_0 = arith.constant 0 : i32
    %c0_i32_1 = arith.constant 0 : i32
    return %c0_i32, %c0_i32_0 : i32, i32
  }
  func.func @transform_9(%arg0: i32) -> (i32, i32) {
    %c0_i32 = arith.constant 0 : i32
    %c0_i32_0 = arith.constant 0 : i32
    return %arg0, %c0_i32 : i32, i32
  }
}

</mosaic_0001>

<llo_original>
// kernel: simple_cnn_forward.1
$region0: #{simple_cnn_forward.1}
  #allocation0 [shape = 'u32[]', space=smem, size = 0x4, offset = 0x4, fixed_abs, tag = 'smem constant byte address 0x4 - core index']
  #allocation1 [shape = 'u32[144,128]{1,0:T(1,128)}', space=vmem, size = 0x12000, scoped, tag = 'internal scratch']
  %s0 = inlined_call_operand.vmem [shape: f32[8,256], index: 0, kind: input, shape index: {}]
  %s1 = inlined_call_operand.hbm [shape: bf16[256,896], index: 1, kind: input, shape index: {}]
  %s2 = inlined_call_operand.vmem [shape: f32[1,896], index: 2, kind: input, shape index: {}]
  %s3 = inlined_call_operand.hbm [shape: bf16[896,256], index: 3, kind: input, shape index: {}]
  %s4 = inlined_call_operand.hbm [shape: f32[1,256], index: 4, kind: input, shape index: {}]
  %s5 = inlined_call_operand.hbm [shape: bf16[256,128], index: 5, kind: input, shape index: {}]
  %s6 = inlined_call_operand.hbm [shape: f32[1,128], index: 6, kind: input, shape index: {}]
  %s7 = inlined_call_operand.vmem [shape: bf16[128,128], index: 7, kind: input, shape index: {}]
  %s8 = inlined_call_operand.hbm [shape: f32[1,128], index: 8, kind: input, shape index: {}]
  %s9 = inlined_call_operand.vmem [shape: f32[8,128], index: 9, kind: output, shape index: {}]
  %s10 = sld [smem:[#allocation0]]
  $region70: #{simple_cnn_forward.1} parent=0
    _
  %s12 = ssub.s32 1, %s10
  %s13 = scalar_select 0, %s12, %s10
  $region1: #{simple_cnn_forward.1} parent=0
    #allocation2 [shape = 'u8[458752]{0}', space=vmem, size = 0x70000, scoped, tag = 'input window, operand 1, single buffered']
    #allocation3 [shape = 's32[1]{0}', space=sflag, size = 0x4, scoped, tag = 'scoped memory for simple_cnn_forward.1']
    #allocation4 [shape = 'u8[458752]{0}', space=vmem, size = 0x70000, scoped, tag = 'input window, operand 3, single buffered']
    #allocation5 [shape = 's32[1]{0}', space=sflag, size = 0x4, scoped, tag = 'scoped memory for simple_cnn_forward.1']
    #allocation6 [shape = 'u8[1024]{0}', space=vmem, size = 0x400, scoped, tag = 'input window, operand 4, single buffered']
    #allocation7 [shape = 'u8[65536]{0}', space=vmem, size = 0x10000, scoped, tag = 'input window, operand 5, single buffered']
    #allocation8 [shape = 's32[1]{0}', space=sflag, size = 0x4, scoped, tag = 'scoped memory for simple_cnn_forward.1']
    #allocation9 [shape = 'u8[512]{0}', space=vmem, size = 0x400, scoped, tag = 'input window, operand 6, single buffered']
    #allocation10 [shape = 'u8[512]{0}', space=vmem, size = 0x400, scoped, tag = 'input window, operand 8, single buffered']
    #allocation11 [shape = 's32[1]{0}', space=sflag, size = 0x4, scoped, tag = 'scoped memory for simple_cnn_forward.1']
    %14 = vsyncpa [#allocation3], 0
    %15 = vsyncpa [#allocation5], 0
    %16 = vsyncpa [#allocation8], 0
    %17 = vsyncpa [#allocation11], 0
    // Predicated region
    $region2: #{simple_cnn_forward.1} parent=1 // pred_check
      _
    $region3: #{simple_cnn_forward.1} parent=1 // pred_check_branch
      %19 = sbr.rel (0) target = $region5
    $region4: #{simple_cnn_forward.1} parent=1 // pred_region
      _
    $region5: #{simple_cnn_forward.1} parent=1 // pred_fallthru
      _
    // Predicated region
    $region6: #{simple_cnn_forward.1} parent=1 // pred_check
      _
    $region7: #{simple_cnn_forward.1} parent=1 // pred_check_branch
      %21 = sbr.rel (0) target = $region9
    $region8: #{simple_cnn_forward.1} parent=1 // pred_region
      %s23 = ssub.s32 14336, 14336
      %24 = vsyncadd [#allocation3], %s23
      %s25 = sshll.u32 [#allocation2], 4
      %s26 = int_to_ptr.vmem [resolvable:$true] %s25
      %31 = dma.hbm_to_vmem [thread:$0]  %s1, 14336, %s26, [#allocation3], 448, 448, 28
    $region9: #{simple_cnn_forward.1} parent=1 // pred_fallthru
      _
    // Predicated region
    $region10: #{simple_cnn_forward.1} parent=1 // pred_check
      _
    $region11: #{simple_cnn_forward.1} parent=1 // pred_check_branch
      %33 = sbr.rel (0) target = $region13
    $region12: #{simple_cnn_forward.1} parent=1 // pred_region
      _
    $region13: #{simple_cnn_forward.1} parent=1 // pred_fallthru
      _
    // Predicated region
    $region14: #{simple_cnn_forward.1} parent=1 // pred_check
      _
    $region15: #{simple_cnn_forward.1} parent=1 // pred_check_branch
      %35 = sbr.rel (0) target = $region17
    $region16: #{simple_cnn_forward.1} parent=1 // pred_region
      %s37 = ssub.s32 14336, 14336
      %38 = vsyncadd [#allocation5], %s37
      %s39 = sshll.u32 [#allocation4], 4
      %s40 = int_to_ptr.vmem [resolvable:$true] %s39
      %45 = dma.hbm_to_vmem [thread:$0]  %s3, 14336, %s40, [#allocation5], 128, 128, 8
    $region17: #{simple_cnn_forward.1} parent=1 // pred_fallthru
      _
    // Predicated region
    $region18: #{simple_cnn_forward.1} parent=1 // pred_check
      _
    $region19: #{simple_cnn_forward.1} parent=1 // pred_check_branch
      %47 = sbr.rel (0) target = $region21
    $region20: #{simple_cnn_forward.1} parent=1 // pred_region
      %s49 = ssub.s32 32, 32
      %50 = vsyncadd [#allocation5], %s49
      %s52 = sshll.u32 [#allocation6], 4
      %s53 = int_to_ptr.vmem [resolvable:$true] %s52
      %55 = dma.hbm_to_vmem [thread:$0]  %s4, 32, %s53, [#allocation5]
    $region21: #{simple_cnn_forward.1} parent=1 // pred_fallthru
      _
    // Predicated region
    $region22: #{simple_cnn_forward.1} parent=1 // pred_check
      _
    $region23: #{simple_cnn_forward.1} parent=1 // pred_check_branch
      %57 = sbr.rel (0) target = $region25
    $region24: #{simple_cnn_forward.1} parent=1 // pred_region
      %s59 = ssub.s32 2048, 2048
      %60 = vsyncadd [#allocation8], %s59
      %s61 = sshll.u32 [#allocation7], 4
      %s62 = int_to_ptr.vmem [resolvable:$true] %s61
      %67 = dma.hbm_to_vmem [thread:$0]  %s5, 2048, %s62, [#allocation8], 64, 64, 4
    $region25: #{simple_cnn_forward.1} parent=1 // pred_fallthru
      _
    // Predicated region
    $region26: #{simple_cnn_forward.1} parent=1 // pred_check
      _
    $region27: #{simple_cnn_forward.1} parent=1 // pred_check_branch
      %69 = sbr.rel (0) target = $region29
    $region28: #{simple_cnn_forward.1} parent=1 // pred_region
      %s71 = ssub.s32 16, 16
      %72 = vsyncadd [#allocation8], %s71
      %s74 = sshll.u32 [#allocation9], 4
      %s75 = int_to_ptr.vmem [resolvable:$true] %s74
      %77 = dma.hbm_to_vmem [thread:$0]  %s6, 16, %s75, [#allocation8]
    $region29: #{simple_cnn_forward.1} parent=1 // pred_fallthru
      _
    // Predicated region
    $region30: #{simple_cnn_forward.1} parent=1 // pred_check
      _
    $region31: #{simple_cnn_forward.1} parent=1 // pred_check_branch
      %79 = sbr.rel (0) target = $region33
    $region32: #{simple_cnn_forward.1} parent=1 // pred_region
      _
    $region33: #{simple_cnn_forward.1} parent=1 // pred_fallthru
      _
    // Predicated region
    $region34: #{simple_cnn_forward.1} parent=1 // pred_check
      _
    $region35: #{simple_cnn_forward.1} parent=1 // pred_check_branch
      %81 = sbr.rel (0) target = $region37
    $region36: #{simple_cnn_forward.1} parent=1 // pred_region
      %s83 = ssub.s32 16, 16
      %84 = vsyncadd [#allocation11], %s83
      %s86 = sshll.u32 [#allocation10], 4
      %s87 = int_to_ptr.vmem [resolvable:$true] %s86
      %89 = dma.hbm_to_vmem [thread:$0]  %s8, 16, %s87, [#allocation11]
    $region37: #{simple_cnn_forward.1} parent=1 // pred_fallthru
      _
    // Predicated region
    $region38: #{simple_cnn_forward.1} parent=1 // pred_check
      _
    $region39: #{simple_cnn_forward.1} parent=1 // pred_check_branch
      %91 = sbr.rel (0) target = $region41
    $region40: #{simple_cnn_forward.1} parent=1 // pred_region
      %92 = dma.done [#allocation3], 14336
    $region41: #{simple_cnn_forward.1} parent=1 // pred_fallthru
      _
    // Predicated region
    $region42: #{simple_cnn_forward.1} parent=1 // pred_check
      _
    $region43: #{simple_cnn_forward.1} parent=1 // pred_check_branch
      %94 = sbr.rel (0) target = $region45
    $region44: #{simple_cnn_forward.1} parent=1 // pred_region
      %95 = dma.done [#allocation5], 14336
    $region45: #{simple_cnn_forward.1} parent=1 // pred_fallthru
      _
    // Predicated region
    $region46: #{simple_cnn_forward.1} parent=1 // pred_check
      _
    $region47: #{simple_cnn_forward.1} parent=1 // pred_check_branch
      %97 = sbr.rel (0) target = $region49
    $region48: #{simple_cnn_forward.1} parent=1 // pred_region
      %98 = dma.done [#allocation5], 32
    $region49: #{simple_cnn_forward.1} parent=1 // pred_fallthru
      _
    // Predicated region
    $region50: #{simple_cnn_forward.1} parent=1 // pred_check
      _
    $region51: #{simple_cnn_forward.1} parent=1 // pred_check_branch
      %100 = sbr.rel (0) target = $region53
    $region52: #{simple_cnn_forward.1} parent=1 // pred_region
      %101 = dma.done [#allocation8], 2048
    $region53: #{simple_cnn_forward.1} parent=1 // pred_fallthru
      _
    // Predicated region
    $region54: #{simple_cnn_forward.1} parent=1 // pred_check
      _
    $region55: #{simple_cnn_forward.1} parent=1 // pred_check_branch
      %103 = sbr.rel (0) target = $region57
    $region56: #{simple_cnn_forward.1} parent=1 // pred_region
      %104 = dma.done [#allocation8], 16
    $region57: #{simple_cnn_forward.1} parent=1 // pred_fallthru
      _
    // Predicated region
    $region58: #{simple_cnn_forward.1} parent=1 // pred_check
      _
    $region59: #{simple_cnn_forward.1} parent=1 // pred_check_branch
      %106 = sbr.rel (0) target = $region61
    $region60: #{simple_cnn_forward.1} parent=1 // pred_region
      %107 = dma.done [#allocation11], 16
    $region61: #{simple_cnn_forward.1} parent=1 // pred_fallthru
      _
    %v109 = vld [vmem:[%s0] sm:$0xff]
    %v110 = vld [vmem:[%s0 + $0x8] sm:$0xff]
    %v111 = vpack.c.bf16 %v109, %v109
    %v112 = vpack.c.bf16 %v110, %v110
    %v113 = vld [vmem:[#allocation2] sm:$0xff]
    %v114 = vld [vmem:[#allocation2 + $0x8] sm:$0xff]
    %v115 = vld [vmem:[#allocation2 + $0x10] sm:$0xff]
    %v116 = vld [vmem:[#allocation2 + $0x18] sm:$0xf]
    %v117 = vld [vmem:[#allocation2 + $0x1c] sm:$0xff]
    %v118 = vld [vmem:[#allocation2 + $0x24] sm:$0xff]
    %v119 = vld [vmem:[#allocation2 + $0x2c] sm:$0xff]
    %v120 = vld [vmem:[#allocation2 + $0x34] sm:$0xf]
    %v121 = vld [vmem:[#allocation2 + $0x38] sm:$0xff]
    %v122 = vld [vmem:[#allocation2 + $0x40] sm:$0xff]
    %v123 = vld [vmem:[#allocation2 + $0x48] sm:$0xff]
    %v124 = vld [vmem:[#allocation2 + $0x50] sm:$0xf]
    %v125 = vld [vmem:[#allocation2 + $0x54] sm:$0xff]
    %v126 = vld [vmem:[#allocation2 + $0x5c] sm:$0xff]
    %v127 = vld [vmem:[#allocation2 + $0x64] sm:$0xff]
    %v128 = vld [vmem:[#allocation2 + $0x6c] sm:$0xf]
    %v129 = vld [vmem:[#allocation2 + $0x70] sm:$0xff]
    %v130 = vld [vmem:[#allocation2 + $0x78] sm:$0xff]
    %v131 = vld [vmem:[#allocation2 + $0x80] sm:$0xff]
    %v132 = vld [vmem:[#allocation2 + $0x88] sm:$0xf]
    %v133 = vld [vmem:[#allocation2 + $0x8c] sm:$0xff]
    %v134 = vld [vmem:[#allocation2 + $0x94] sm:$0xff]
    %v135 = vld [vmem:[#allocation2 + $0x9c] sm:$0xff]
    %v136 = vld [vmem:[#allocation2 + $0xa4] sm:$0xf]
    %v137 = vld [vmem:[#allocation2 + $0xa8] sm:$0xff]
    %v138 = vld [vmem:[#allocation2 + $0xb0] sm:$0xff]
    %v139 = vld [vmem:[#allocation2 + $0xb8] sm:$0xff]
    %v140 = vld [vmem:[#allocation2 + $0xc0] sm:$0xf]
    %v141 = vld [vmem:[#allocation2 + $0xc4] sm:$0xff]
    %v142 = vld [vmem:[#allocation2 + $0xcc] sm:$0xff]
    %v143 = vld [vmem:[#allocation2 + $0xd4] sm:$0xff]
    %v144 = vld [vmem:[#allocation2 + $0xdc] sm:$0xf]
    %v145 = vld [vmem:[#allocation2 + $0xe0] sm:$0xff]
    %v146 = vld [vmem:[#allocation2 + $0xe8] sm:$0xff]
    %v147 = vld [vmem:[#allocation2 + $0xf0] sm:$0xff]
    %v148 = vld [vmem:[#allocation2 + $0xf8] sm:$0xf]
    %v149 = vld [vmem:[#allocation2 + $0xfc] sm:$0xff]
    %v150 = vld [vmem:[#allocation2 + $0x104] sm:$0xff]
    %v151 = vld [vmem:[#allocation2 + $0x10c] sm:$0xff]
    %v152 = vld [vmem:[#allocation2 + $0x114] sm:$0xf]
    %v153 = vld [vmem:[#allocation2 + $0x118] sm:$0xff]
    %v154 = vld [vmem:[#allocation2 + $0x120] sm:$0xff]
    %v155 = vld [vmem:[#allocation2 + $0x128] sm:$0xff]
    %v156 = vld [vmem:[#allocation2 + $0x130] sm:$0xf]
    %v157 = vld [vmem:[#allocation2 + $0x134] sm:$0xff]
    %v158 = vld [vmem:[#allocation2 + $0x13c] sm:$0xff]
    %v159 = vld [vmem:[#allocation2 + $0x144] sm:$0xff]
    %v160 = vld [vmem:[#allocation2 + $0x14c] sm:$0xf]
    %v161 = vld [vmem:[#allocation2 + $0x150] sm:$0xff]
    %v162 = vld [vmem:[#allocation2 + $0x158] sm:$0xff]
    %v163 = vld [vmem:[#allocation2 + $0x160] sm:$0xff]
    %v164 = vld [vmem:[#allocation2 + $0x168] sm:$0xf]
    %v165 = vld [vmem:[#allocation2 + $0x16c] sm:$0xff]
    %v166 = vld [vmem:[#allocation2 + $0x174] sm:$0xff]
    %v167 = vld [vmem:[#allocation2 + $0x17c] sm:$0xff]
    %v168 = vld [vmem:[#allocation2 + $0x184] sm:$0xf]
    %v169 = vld [vmem:[#allocation2 + $0x188] sm:$0xff]
    %v170 = vld [vmem:[#allocation2 + $0x190] sm:$0xff]
    %v171 = vld [vmem:[#allocation2 + $0x198] sm:$0xff]
    %v172 = vld [vmem:[#allocation2 + $0x1a0] sm:$0xf]
    %v173 = vld [vmem:[#allocation2 + $0x1a4] sm:$0xff]
    %v174 = vld [vmem:[#allocation2 + $0x1ac] sm:$0xff]
    %v175 = vld [vmem:[#allocation2 + $0x1b4] sm:$0xff]
    %v176 = vld [vmem:[#allocation2 + $0x1bc] sm:$0xf]
    %v177 = vld [vmem:[#allocation2 + $0x1c0] sm:$0xff]
    %v178 = vld [vmem:[#allocation2 + $0x1c8] sm:$0xff]
    %v179 = vld [vmem:[#allocation2 + $0x1d0] sm:$0xff]
    %v180 = vld [vmem:[#allocation2 + $0x1d8] sm:$0xf]
    %v181 = vld [vmem:[#allocation2 + $0x1dc] sm:$0xff]
    %v182 = vld [vmem:[#allocation2 + $0x1e4] sm:$0xff]
    %v183 = vld [vmem:[#allocation2 + $0x1ec] sm:$0xff]
    %v184 = vld [vmem:[#allocation2 + $0x1f4] sm:$0xf]
    %v185 = vld [vmem:[#allocation2 + $0x1f8] sm:$0xff]
    %v186 = vld [vmem:[#allocation2 + $0x200] sm:$0xff]
    %v187 = vld [vmem:[#allocation2 + $0x208] sm:$0xff]
    %v188 = vld [vmem:[#allocation2 + $0x210] sm:$0xf]
    %v189 = vld [vmem:[#allocation2 + $0x214] sm:$0xff]
    %v190 = vld [vmem:[#allocation2 + $0x21c] sm:$0xff]
    %v191 = vld [vmem:[#allocation2 + $0x224] sm:$0xff]
    %v192 = vld [vmem:[#allocation2 + $0x22c] sm:$0xf]
    %v193 = vld [vmem:[#allocation2 + $0x230] sm:$0xff]
    %v194 = vld [vmem:[#allocation2 + $0x238] sm:$0xff]
    %v195 = vld [vmem:[#allocation2 + $0x240] sm:$0xff]
    %v196 = vld [vmem:[#allocation2 + $0x248] sm:$0xf]
    %v197 = vld [vmem:[#allocation2 + $0x24c] sm:$0xff]
    %v198 = vld [vmem:[#allocation2 + $0x254] sm:$0xff]
    %v199 = vld [vmem:[#allocation2 + $0x25c] sm:$0xff]
    %v200 = vld [vmem:[#allocation2 + $0x264] sm:$0xf]
    %v201 = vld [vmem:[#allocation2 + $0x268] sm:$0xff]
    %v202 = vld [vmem:[#allocation2 + $0x270] sm:$0xff]
    %v203 = vld [vmem:[#allocation2 + $0x278] sm:$0xff]
    %v204 = vld [vmem:[#allocation2 + $0x280] sm:$0xf]
    %v205 = vld [vmem:[#allocation2 + $0x284] sm:$0xff]
    %v206 = vld [vmem:[#allocation2 + $0x28c] sm:$0xff]
    %v207 = vld [vmem:[#allocation2 + $0x294] sm:$0xff]
    %v208 = vld [vmem:[#allocation2 + $0x29c] sm:$0xf]
    %v209 = vld [vmem:[#allocation2 + $0x2a0] sm:$0xff]
    %v210 = vld [vmem:[#allocation2 + $0x2a8] sm:$0xff]
    %v211 = vld [vmem:[#allocation2 + $0x2b0] sm:$0xff]
    %v212 = vld [vmem:[#allocation2 + $0x2b8] sm:$0xf]
    %v213 = vld [vmem:[#allocation2 + $0x2bc] sm:$0xff]
    %v214 = vld [vmem:[#allocation2 + $0x2c4] sm:$0xff]
    %v215 = vld [vmem:[#allocation2 + $0x2cc] sm:$0xff]
    %v216 = vld [vmem:[#allocation2 + $0x2d4] sm:$0xf]
    %v217 = vld [vmem:[#allocation2 + $0x2d8] sm:$0xff]
    %v218 = vld [vmem:[#allocation2 + $0x2e0] sm:$0xff]
    %v219 = vld [vmem:[#allocation2 + $0x2e8] sm:$0xff]
    %v220 = vld [vmem:[#allocation2 + $0x2f0] sm:$0xf]
    %v221 = vld [vmem:[#allocation2 + $0x2f4] sm:$0xff]
    %v222 = vld [vmem:[#allocation2 + $0x2fc] sm:$0xff]
    %v223 = vld [vmem:[#allocation2 + $0x304] sm:$0xff]
    %v224 = vld [vmem:[#allocation2 + $0x30c] sm:$0xf]
    %v225 = vld [vmem:[#allocation2 + $0x310] sm:$0xff]
    %v226 = vld [vmem:[#allocation2 + $0x318] sm:$0xff]
    %v227 = vld [vmem:[#allocation2 + $0x320] sm:$0xff]
    %v228 = vld [vmem:[#allocation2 + $0x328] sm:$0xf]
    %v229 = vld [vmem:[#allocation2 + $0x32c] sm:$0xff]
    %v230 = vld [vmem:[#allocation2 + $0x334] sm:$0xff]
    %v231 = vld [vmem:[#allocation2 + $0x33c] sm:$0xff]
    %v232 = vld [vmem:[#allocation2 + $0x344] sm:$0xf]
    %v233 = vld [vmem:[#allocation2 + $0x348] sm:$0xff]
    %v234 = vld [vmem:[#allocation2 + $0x350] sm:$0xff]
    %v235 = vld [vmem:[#allocation2 + $0x358] sm:$0xff]
    %v236 = vld [vmem:[#allocation2 + $0x360] sm:$0xf]
    %v237 = vld [vmem:[#allocation2 + $0x364] sm:$0xff]
    %v238 = vld [vmem:[#allocation2 + $0x36c] sm:$0xff]
    %v239 = vld [vmem:[#allocation2 + $0x374] sm:$0xff]
    %v240 = vld [vmem:[#allocation2 + $0x37c] sm:$0xf]
    %v241 = vld [vmem:[%s2] sm:$0xff]
    %v243 = vlaneseq
    %v244 = vshrl.u32 %v243, 7
    %v245 = vsub.s32 0, %v244
    %v246 = vrot.slane %v241, %v245
    %v247 = vlaneseq
    %v248 = vshrl.u32 %v247, 7
    %v249 = vsub.s32 1, %v248
    %v250 = vrot.slane %v241, %v249
    %v251 = vlaneseq
    %v252 = vshrl.u32 %v251, 7
    %v253 = vsub.s32 2, %v252
    %v254 = vrot.slane %v241, %v253
    %v255 = vlaneseq
    %v256 = vshrl.u32 %v255, 7
    %v257 = vsub.s32 3, %v256
    %v258 = vrot.slane %v241, %v257
    %v259 = vlaneseq
    %v260 = vshrl.u32 %v259, 7
    %v261 = vsub.s32 4, %v260
    %v262 = vrot.slane %v241, %v261
    %v263 = vlaneseq
    %v264 = vshrl.u32 %v263, 7
    %v265 = vsub.s32 5, %v264
    %v266 = vrot.slane %v241, %v265
    %v267 = vlaneseq
    %v268 = vshrl.u32 %v267, 7
    %v269 = vsub.s32 6, %v268
    %v270 = vrot.slane %v241, %v269
    %v406 = vunpack.c.l.b16 %v113
    %v407 = vunpack.c.h.b16 %v113
    %v408 = vunpack.c.l.b16 %v114
    %v409 = vunpack.c.h.b16 %v114
    %v410 = vunpack.c.l.b16 %v115
    %v411 = vunpack.c.h.b16 %v115
    %v412 = vunpack.c.l.b16 %v116
    %v413 = vunpack.c.l.b16 %v117
    %v414 = vunpack.c.h.b16 %v117
    %v415 = vunpack.c.l.b16 %v118
    %v416 = vunpack.c.h.b16 %v118
    %v417 = vunpack.c.l.b16 %v119
    %v418 = vunpack.c.h.b16 %v119
    %v419 = vunpack.c.l.b16 %v120
    %v420 = vunpack.c.l.b16 %v121
    %v421 = vunpack.c.h.b16 %v121
    %v422 = vunpack.c.l.b16 %v122
    %v423 = vunpack.c.h.b16 %v122
    %v424 = vunpack.c.l.b16 %v123
    %v425 = vunpack.c.h.b16 %v123
    %v426 = vunpack.c.l.b16 %v124
    %v427 = vunpack.c.l.b16 %v125
    %v428 = vunpack.c.h.b16 %v125
    %v429 = vunpack.c.l.b16 %v126
    %v430 = vunpack.c.h.b16 %v126
    %v431 = vunpack.c.l.b16 %v127
    %v432 = vunpack.c.h.b16 %v127
    %v433 = vunpack.c.l.b16 %v128
    %v434 = vunpack.c.l.b16 %v129
    %v435 = vunpack.c.h.b16 %v129
    %v436 = vunpack.c.l.b16 %v130
    %v437 = vunpack.c.h.b16 %v130
    %v438 = vunpack.c.l.b16 %v131
    %v439 = vunpack.c.h.b16 %v131
    %v440 = vunpack.c.l.b16 %v132
    %v441 = vunpack.c.l.b16 %v133
    %v442 = vunpack.c.h.b16 %v133
    %v443 = vunpack.c.l.b16 %v134
    %v444 = vunpack.c.h.b16 %v134
    %v445 = vunpack.c.l.b16 %v135
    %v446 = vunpack.c.h.b16 %v135
    %v447 = vunpack.c.l.b16 %v136
    %v448 = vunpack.c.l.b16 %v137
    %v449 = vunpack.c.h.b16 %v137
    %v450 = vunpack.c.l.b16 %v138
    %v451 = vunpack.c.h.b16 %v138
    %v452 = vunpack.c.l.b16 %v139
    %v453 = vunpack.c.h.b16 %v139
    %v454 = vunpack.c.l.b16 %v140
    %v455 = vunpack.c.l.b16 %v141
    %v456 = vunpack.c.h.b16 %v141
    %v457 = vunpack.c.l.b16 %v142
    %v458 = vunpack.c.h.b16 %v142
    %v459 = vunpack.c.l.b16 %v143
    %v460 = vunpack.c.h.b16 %v143
    %v461 = vunpack.c.l.b16 %v144
    %v462 = vunpack.c.l.b16 %v145
    %v463 = vunpack.c.h.b16 %v145
    %v464 = vunpack.c.l.b16 %v146
    %v465 = vunpack.c.h.b16 %v146
    %v466 = vunpack.c.l.b16 %v147
    %v467 = vunpack.c.h.b16 %v147
    %v468 = vunpack.c.l.b16 %v148
    %v469 = vunpack.c.l.b16 %v149
    %v470 = vunpack.c.h.b16 %v149
    %v471 = vunpack.c.l.b16 %v150
    %v472 = vunpack.c.h.b16 %v150
    %v473 = vunpack.c.l.b16 %v151
    %v474 = vunpack.c.h.b16 %v151
    %v475 = vunpack.c.l.b16 %v152
    %v476 = vunpack.c.l.b16 %v153
    %v477 = vunpack.c.h.b16 %v153
    %v478 = vunpack.c.l.b16 %v154
    %v479 = vunpack.c.h.b16 %v154
    %v480 = vunpack.c.l.b16 %v155
    %v481 = vunpack.c.h.b16 %v155
    %v482 = vunpack.c.l.b16 %v156
    %v483 = vunpack.c.l.b16 %v157
    %v484 = vunpack.c.h.b16 %v157
    %v485 = vunpack.c.l.b16 %v158
    %v486 = vunpack.c.h.b16 %v158
    %v487 = vunpack.c.l.b16 %v159
    %v488 = vunpack.c.h.b16 %v159
    %v489 = vunpack.c.l.b16 %v160
    %v490 = vunpack.c.l.b16 %v161
    %v491 = vunpack.c.h.b16 %v161
    %v492 = vunpack.c.l.b16 %v162
    %v493 = vunpack.c.h.b16 %v162
    %v494 = vunpack.c.l.b16 %v163
    %v495 = vunpack.c.h.b16 %v163
    %v496 = vunpack.c.l.b16 %v164
    %v497 = vunpack.c.l.b16 %v165
    %v498 = vunpack.c.h.b16 %v165
    %v499 = vunpack.c.l.b16 %v166
    %v500 = vunpack.c.h.b16 %v166
    %v501 = vunpack.c.l.b16 %v167
    %v502 = vunpack.c.h.b16 %v167
    %v503 = vunpack.c.l.b16 %v168
    %v504 = vunpack.c.l.b16 %v169
    %v505 = vunpack.c.h.b16 %v169
    %v506 = vunpack.c.l.b16 %v170
    %v507 = vunpack.c.h.b16 %v170
    %v508 = vunpack.c.l.b16 %v171
    %v509 = vunpack.c.h.b16 %v171
    %v510 = vunpack.c.l.b16 %v172
    %v511 = vunpack.c.l.b16 %v173
    %v512 = vunpack.c.h.b16 %v173
    %v513 = vunpack.c.l.b16 %v174
    %v514 = vunpack.c.h.b16 %v174
    %v515 = vunpack.c.l.b16 %v175
    %v516 = vunpack.c.h.b16 %v175
    %v517 = vunpack.c.l.b16 %v176
    %v518 = vunpack.c.l.b16 %v177
    %v519 = vunpack.c.h.b16 %v177
    %v520 = vunpack.c.l.b16 %v178
    %v521 = vunpack.c.h.b16 %v178
    %v522 = vunpack.c.l.b16 %v179
    %v523 = vunpack.c.h.b16 %v179
    %v524 = vunpack.c.l.b16 %v180
    %v525 = vunpack.c.l.b16 %v181
    %v526 = vunpack.c.h.b16 %v181
    %v527 = vunpack.c.l.b16 %v182
    %v528 = vunpack.c.h.b16 %v182
    %v529 = vunpack.c.l.b16 %v183
    %v530 = vunpack.c.h.b16 %v183
    %v531 = vunpack.c.l.b16 %v184
    %v532 = vunpack.c.l.b16 %v185
    %v533 = vunpack.c.h.b16 %v185
    %v534 = vunpack.c.l.b16 %v186
    %v535 = vunpack.c.h.b16 %v186
    %v536 = vunpack.c.l.b16 %v187
    %v537 = vunpack.c.h.b16 %v187
    %v538 = vunpack.c.l.b16 %v188
    %v539 = vunpack.c.l.b16 %v189
    %v540 = vunpack.c.h.b16 %v189
    %v541 = vunpack.c.l.b16 %v190
    %v542 = vunpack.c.h.b16 %v190
    %v543 = vunpack.c.l.b16 %v191
    %v544 = vunpack.c.h.b16 %v191
    %v545 = vunpack.c.l.b16 %v192
    %v546 = vunpack.c.l.b16 %v193
    %v547 = vunpack.c.h.b16 %v193
    %v548 = vunpack.c.l.b16 %v194
    %v549 = vunpack.c.h.b16 %v194
    %v550 = vunpack.c.l.b16 %v195
    %v551 = vunpack.c.h.b16 %v195
    %v552 = vunpack.c.l.b16 %v196
    %v553 = vunpack.c.l.b16 %v197
    %v554 = vunpack.c.h.b16 %v197
    %v555 = vunpack.c.l.b16 %v198
    %v556 = vunpack.c.h.b16 %v198
    %v557 = vunpack.c.l.b16 %v199
    %v558 = vunpack.c.h.b16 %v199
    %v559 = vunpack.c.l.b16 %v200
    %v560 = vunpack.c.l.b16 %v201
    %v561 = vunpack.c.h.b16 %v201
    %v562 = vunpack.c.l.b16 %v202
    %v563 = vunpack.c.h.b16 %v202
    %v564 = vunpack.c.l.b16 %v203
    %v565 = vunpack.c.h.b16 %v203
    %v566 = vunpack.c.l.b16 %v204
    %v567 = vunpack.c.l.b16 %v205
    %v568 = vunpack.c.h.b16 %v205
    %v569 = vunpack.c.l.b16 %v206
    %v570 = vunpack.c.h.b16 %v206
    %v571 = vunpack.c.l.b16 %v207
    %v572 = vunpack.c.h.b16 %v207
    %v573 = vunpack.c.l.b16 %v208
    %v574 = vunpack.c.l.b16 %v209
    %v575 = vunpack.c.h.b16 %v209
    %v576 = vunpack.c.l.b16 %v210
    %v577 = vunpack.c.h.b16 %v210
    %v578 = vunpack.c.l.b16 %v211
    %v579 = vunpack.c.h.b16 %v211
    %v580 = vunpack.c.l.b16 %v212
    %v581 = vunpack.c.l.b16 %v213
    %v582 = vunpack.c.h.b16 %v213
    %v583 = vunpack.c.l.b16 %v214
    %v584 = vunpack.c.h.b16 %v214
    %v585 = vunpack.c.l.b16 %v215
    %v586 = vunpack.c.h.b16 %v215
    %v587 = vunpack.c.l.b16 %v216
    %v588 = vunpack.c.l.b16 %v217
    %v589 = vunpack.c.h.b16 %v217
    %v590 = vunpack.c.l.b16 %v218
    %v591 = vunpack.c.h.b16 %v218
    %v592 = vunpack.c.l.b16 %v219
    %v593 = vunpack.c.h.b16 %v219
    %v594 = vunpack.c.l.b16 %v220
    %v595 = vunpack.c.l.b16 %v221
    %v596 = vunpack.c.h.b16 %v221
    %v597 = vunpack.c.l.b16 %v222
    %v598 = vunpack.c.h.b16 %v222
    %v599 = vunpack.c.l.b16 %v223
    %v600 = vunpack.c.h.b16 %v223
    %v601 = vunpack.c.l.b16 %v224
    %v602 = vunpack.c.l.b16 %v225
    %v603 = vunpack.c.h.b16 %v225
    %v604 = vunpack.c.l.b16 %v226
    %v605 = vunpack.c.h.b16 %v226
    %v606 = vunpack.c.l.b16 %v227
    %v607 = vunpack.c.h.b16 %v227
    %v608 = vunpack.c.l.b16 %v228
    %v609 = vunpack.c.l.b16 %v229
    %v610 = vunpack.c.h.b16 %v229
    %v611 = vunpack.c.l.b16 %v230
    %v612 = vunpack.c.h.b16 %v230
    %v613 = vunpack.c.l.b16 %v231
    %v614 = vunpack.c.h.b16 %v231
    %v615 = vunpack.c.l.b16 %v232
    %v616 = vunpack.c.l.b16 %v233
    %v617 = vunpack.c.h.b16 %v233
    %v618 = vunpack.c.l.b16 %v234
    %v619 = vunpack.c.h.b16 %v234
    %v620 = vunpack.c.l.b16 %v235
    %v621 = vunpack.c.h.b16 %v235
    %v622 = vunpack.c.l.b16 %v236
    %v623 = vunpack.c.l.b16 %v237
    %v624 = vunpack.c.h.b16 %v237
    %v625 = vunpack.c.l.b16 %v238
    %v626 = vunpack.c.h.b16 %v238
    %v627 = vunpack.c.l.b16 %v239
    %v628 = vunpack.c.h.b16 %v239
    %v629 = vunpack.c.l.b16 %v240
    %v630 = vpack.c.b16 %v413, %v406
    %v631 = vpack.c.b16 %v414, %v407
    %v632 = vpack.c.b16 %v415, %v408
    %v633 = vpack.c.b16 %v416, %v409
    %v634 = vpack.c.b16 %v417, %v410
    %v635 = vpack.c.b16 %v418, %v411
    %v636 = vpack.c.b16 %v419, %v412
    %v637 = vpack.c.b16 %v427, %v420
    %v638 = vpack.c.b16 %v428, %v421
    %v639 = vpack.c.b16 %v429, %v422
    %v640 = vpack.c.b16 %v430, %v423
    %v641 = vpack.c.b16 %v431, %v424
    %v642 = vpack.c.b16 %v432, %v425
    %v643 = vpack.c.b16 %v433, %v426
    %v644 = vpack.c.b16 %v441, %v434
    %v645 = vpack.c.b16 %v442, %v435
    %v646 = vpack.c.b16 %v443, %v436
    %v647 = vpack.c.b16 %v444, %v437
    %v648 = vpack.c.b16 %v445, %v438
    %v649 = vpack.c.b16 %v446, %v439
    %v650 = vpack.c.b16 %v447, %v440
    %v651 = vpack.c.b16 %v455, %v448
    %v652 = vpack.c.b16 %v456, %v449
    %v653 = vpack.c.b16 %v457, %v450
    %v654 = vpack.c.b16 %v458, %v451
    %v655 = vpack.c.b16 %v459, %v452
    %v656 = vpack.c.b16 %v460, %v453
    %v657 = vpack.c.b16 %v461, %v454
    %v658 = vpack.c.b16 %v469, %v462
    %v659 = vpack.c.b16 %v470, %v463
    %v660 = vpack.c.b16 %v471, %v464
    %v661 = vpack.c.b16 %v472, %v465
    %v662 = vpack.c.b16 %v473, %v466
    %v663 = vpack.c.b16 %v474, %v467
    %v664 = vpack.c.b16 %v475, %v468
    %v665 = vpack.c.b16 %v483, %v476
    %v666 = vpack.c.b16 %v484, %v477
    %v667 = vpack.c.b16 %v485, %v478
    %v668 = vpack.c.b16 %v486, %v479
    %v669 = vpack.c.b16 %v487, %v480
    %v670 = vpack.c.b16 %v488, %v481
    %v671 = vpack.c.b16 %v489, %v482
    %v672 = vpack.c.b16 %v497, %v490
    %v673 = vpack.c.b16 %v498, %v491
    %v674 = vpack.c.b16 %v499, %v492
    %v675 = vpack.c.b16 %v500, %v493
    %v676 = vpack.c.b16 %v501, %v494
    %v677 = vpack.c.b16 %v502, %v495
    %v678 = vpack.c.b16 %v503, %v496
    %v679 = vpack.c.b16 %v511, %v504
    %v680 = vpack.c.b16 %v512, %v505
    %v681 = vpack.c.b16 %v513, %v506
    %v682 = vpack.c.b16 %v514, %v507
    %v683 = vpack.c.b16 %v515, %v508
    %v684 = vpack.c.b16 %v516, %v509
    %v685 = vpack.c.b16 %v517, %v510
    %v686 = vpack.c.b16 %v525, %v518
    %v687 = vpack.c.b16 %v526, %v519
    %v688 = vpack.c.b16 %v527, %v520
    %v689 = vpack.c.b16 %v528, %v521
    %v690 = vpack.c.b16 %v529, %v522
    %v691 = vpack.c.b16 %v530, %v523
    %v692 = vpack.c.b16 %v531, %v524
    %v693 = vpack.c.b16 %v539, %v532
    %v694 = vpack.c.b16 %v540, %v533
    %v695 = vpack.c.b16 %v541, %v534
    %v696 = vpack.c.b16 %v542, %v535
    %v697 = vpack.c.b16 %v543, %v536
    %v698 = vpack.c.b16 %v544, %v537
    %v699 = vpack.c.b16 %v545, %v538
    %v700 = vpack.c.b16 %v553, %v546
    %v701 = vpack.c.b16 %v554, %v547
    %v702 = vpack.c.b16 %v555, %v548
    %v703 = vpack.c.b16 %v556, %v549
    %v704 = vpack.c.b16 %v557, %v550
    %v705 = vpack.c.b16 %v558, %v551
    %v706 = vpack.c.b16 %v559, %v552
    %v707 = vpack.c.b16 %v567, %v560
    %v708 = vpack.c.b16 %v568, %v561
    %v709 = vpack.c.b16 %v569, %v562
    %v710 = vpack.c.b16 %v570, %v563
    %v711 = vpack.c.b16 %v571, %v564
    %v712 = vpack.c.b16 %v572, %v565
    %v713 = vpack.c.b16 %v573, %v566
    %v714 = vpack.c.b16 %v581, %v574
    %v715 = vpack.c.b16 %v582, %v575
    %v716 = vpack.c.b16 %v583, %v576
    %v717 = vpack.c.b16 %v584, %v577
    %v718 = vpack.c.b16 %v585, %v578
    %v719 = vpack.c.b16 %v586, %v579
    %v720 = vpack.c.b16 %v587, %v580
    %v721 = vpack.c.b16 %v595, %v588
    %v722 = vpack.c.b16 %v596, %v589
    %v723 = vpack.c.b16 %v597, %v590
    %v724 = vpack.c.b16 %v598, %v591
    %v725 = vpack.c.b16 %v599, %v592
    %v726 = vpack.c.b16 %v600, %v593
    %v727 = vpack.c.b16 %v601, %v594
    %v728 = vpack.c.b16 %v609, %v602
    %v729 = vpack.c.b16 %v610, %v603
    %v730 = vpack.c.b16 %v611, %v604
    %v731 = vpack.c.b16 %v612, %v605
    %v732 = vpack.c.b16 %v613, %v606
    %v733 = vpack.c.b16 %v614, %v607
    %v734 = vpack.c.b16 %v615, %v608
    %v735 = vpack.c.b16 %v623, %v616
    %v736 = vpack.c.b16 %v624, %v617
    %v737 = vpack.c.b16 %v625, %v618
    %v738 = vpack.c.b16 %v626, %v619
    %v739 = vpack.c.b16 %v627, %v620
    %v740 = vpack.c.b16 %v628, %v621
    %v741 = vpack.c.b16 %v629, %v622
    %854 = vmatprep.subr.bf16.mxu0 %v680
    %855 = vmatpush1.bf16.msra.mxu0 %v679
    %856 = vmatprep.subr.bf16.mxu0 %v673
    %857 = vmatpush1.bf16.msra.mxu0 %v672
    %858 = vmatprep.subr.bf16.mxu0 %v666
    %859 = vmatpush1.bf16.msra.mxu0 %v665
    %860 = vmatprep.subr.bf16.mxu0 %v659
    %861 = vmatpush1.bf16.msra.mxu0 %v658
    %862 = vmatprep.subr.bf16.mxu0 %v652
    %863 = vmatpush1.bf16.msra.mxu0 %v651
    %864 = vmatprep.subr.bf16.mxu0 %v645
    %865 = vmatpush1.bf16.msra.mxu0 %v644
    %866 = vmatprep.subr.bf16.mxu0 %v638
    %867 = vmatpush1.bf16.msra.mxu0 %v637
    %868 = vmatprep.subr.bf16.mxu0 %v631
    %869 = vmatpush1.bf16.msra.mxu0 %v630
    %870 = vmatprep.subr.bf16.mxu0 %v736
    %871 = vmatpush2.bf16.msra.mxu0 %v735
    %872 = vmatprep.subr.bf16.mxu0 %v729
    %873 = vmatpush2.bf16.msra.mxu0 %v728
    %874 = vmatprep.subr.bf16.mxu0 %v722
    %875 = vmatpush2.bf16.msra.mxu0 %v721
    %876 = vmatprep.subr.bf16.mxu0 %v715
    %877 = vmatpush2.bf16.msra.mxu0 %v714
    %878 = vmatprep.subr.bf16.mxu0 %v708
    %879 = vmatpush2.bf16.msra.mxu0 %v707
    %880 = vmatprep.subr.bf16.mxu0 %v701
    %881 = vmatpush2.bf16.msra.mxu0 %v700
    %882 = vmatprep.subr.bf16.mxu0 %v694
    %883 = vmatpush2.bf16.msra.mxu0 %v693
    %884 = vmatprep.subr.bf16.mxu0 %v687
    %885 = vmatpush2.bf16.msra.mxu0 %v686
    %886 = vmatprep.mubr.bf16.mxu0 %v112
    %887 = vmatmul.mubr.bf16.gmra.mxu0 %v111
    %v888 = vpop.f32.mrf.mxu0
    %v889 = vadd.f32 %v246, %v888
    %v890 = vpop.f32.mrf.mxu0
    %v891 = vadd.f32 %v250, %v890
    %v892 = vpop.f32.mrf.mxu0
    %v893 = vpop.f32.mrf.mxu0
    %894 = vdwg.mxu0
    %895 = vmatprep.subr.bf16.mxu0 %v682
    %896 = vmatpush1.bf16.msra.mxu0 %v681
    %897 = vmatprep.subr.bf16.mxu0 %v675
    %898 = vmatpush1.bf16.msra.mxu0 %v674
    %899 = vmatprep.subr.bf16.mxu0 %v668
    %900 = vmatpush1.bf16.msra.mxu0 %v667
    %901 = vmatprep.subr.bf16.mxu0 %v661
    %902 = vmatpush1.bf16.msra.mxu0 %v660
    %903 = vmatprep.subr.bf16.mxu0 %v654
    %904 = vmatpush1.bf16.msra.mxu0 %v653
    %905 = vmatprep.subr.bf16.mxu0 %v647
    %906 = vmatpush1.bf16.msra.mxu0 %v646
    %907 = vmatprep.subr.bf16.mxu0 %v640
    %908 = vmatpush1.bf16.msra.mxu0 %v639
    %909 = vmatprep.subr.bf16.mxu0 %v633
    %910 = vmatpush1.bf16.msra.mxu0 %v632
    %911 = vmatprep.subr.bf16.mxu0 %v738
    %912 = vmatpush2.bf16.msra.mxu0 %v737
    %913 = vmatprep.subr.bf16.mxu0 %v731
    %914 = vmatpush2.bf16.msra.mxu0 %v730
    %915 = vmatprep.subr.bf16.mxu0 %v724
    %916 = vmatpush2.bf16.msra.mxu0 %v723
    %917 = vmatprep.subr.bf16.mxu0 %v717
    %918 = vmatpush2.bf16.msra.mxu0 %v716
    %919 = vmatprep.subr.bf16.mxu0 %v710
    %920 = vmatpush2.bf16.msra.mxu0 %v709
    %921 = vmatprep.subr.bf16.mxu0 %v703
    %922 = vmatpush2.bf16.msra.mxu0 %v702
    %923 = vmatprep.subr.bf16.mxu0 %v696
    %924 = vmatpush2.bf16.msra.mxu0 %v695
    %925 = vmatprep.subr.bf16.mxu0 %v689
    %926 = vmatpush2.bf16.msra.mxu0 %v688
    %927 = vmatprep.mubr.bf16.mxu0 %v112
    %928 = vmatmul.mubr.bf16.gmra.mxu0 %v111
    %v929 = vpop.f32.mrf.mxu0
    %v930 = vadd.f32 %v254, %v929
    %v931 = vpop.f32.mrf.mxu0
    %v932 = vadd.f32 %v258, %v931
    %v933 = vpop.f32.mrf.mxu0
    %v934 = vpop.f32.mrf.mxu0
    %935 = vdwg.mxu0
    %936 = vmatprep.subr.bf16.mxu0 %v684
    %937 = vmatpush1.bf16.msra.mxu0 %v683
    %938 = vmatprep.subr.bf16.mxu0 %v677
    %939 = vmatpush1.bf16.msra.mxu0 %v676
    %940 = vmatprep.subr.bf16.mxu0 %v670
    %941 = vmatpush1.bf16.msra.mxu0 %v669
    %942 = vmatprep.subr.bf16.mxu0 %v663
    %943 = vmatpush1.bf16.msra.mxu0 %v662
    %944 = vmatprep.subr.bf16.mxu0 %v656
    %945 = vmatpush1.bf16.msra.mxu0 %v655
    %946 = vmatprep.subr.bf16.mxu0 %v649
    %947 = vmatpush1.bf16.msra.mxu0 %v648
    %948 = vmatprep.subr.bf16.mxu0 %v642
    %949 = vmatpush1.bf16.msra.mxu0 %v641
    %950 = vmatprep.subr.bf16.mxu0 %v635
    %951 = vmatpush1.bf16.msra.mxu0 %v634
    %952 = vmatprep.subr.bf16.mxu0 %v740
    %953 = vmatpush2.bf16.msra.mxu0 %v739
    %954 = vmatprep.subr.bf16.mxu0 %v733
    %955 = vmatpush2.bf16.msra.mxu0 %v732
    %956 = vmatprep.subr.bf16.mxu0 %v726
    %957 = vmatpush2.bf16.msra.mxu0 %v725
    %958 = vmatprep.subr.bf16.mxu0 %v719
    %959 = vmatpush2.bf16.msra.mxu0 %v718
    %960 = vmatprep.subr.bf16.mxu0 %v712
    %961 = vmatpush2.bf16.msra.mxu0 %v711
    %962 = vmatprep.subr.bf16.mxu0 %v705
    %963 = vmatpush2.bf16.msra.mxu0 %v704
    %964 = vmatprep.subr.bf16.mxu0 %v698
    %965 = vmatpush2.bf16.msra.mxu0 %v697
    %966 = vmatprep.subr.bf16.mxu0 %v691
    %967 = vmatpush2.bf16.msra.mxu0 %v690
    %968 = vmatprep.mubr.bf16.mxu0 %v112
    %969 = vmatmul.mubr.bf16.gmra.mxu0 %v111
    %v970 = vpop.f32.mrf.mxu0
    %v971 = vadd.f32 %v262, %v970
    %v972 = vpop.f32.mrf.mxu0
    %v973 = vadd.f32 %v266, %v972
    %v974 = vpop.f32.mrf.mxu0
    %v975 = vpop.f32.mrf.mxu0
    %976 = vdwg.mxu0
    %977 = vmatprep.subr.bf16.mxu0 0
    %978 = vmatpush1.bf16.msra.mxu0 %v685
    %979 = vmatprep.subr.bf16.mxu0 0
    %980 = vmatpush1.bf16.msra.mxu0 %v678
    %981 = vmatprep.subr.bf16.mxu0 0
    %982 = vmatpush1.bf16.msra.mxu0 %v671
    %983 = vmatprep.subr.bf16.mxu0 0
    %984 = vmatpush1.bf16.msra.mxu0 %v664
    %985 = vmatprep.subr.bf16.mxu0 0
    %986 = vmatpush1.bf16.msra.mxu0 %v657
    %987 = vmatprep.subr.bf16.mxu0 0
    %988 = vmatpush1.bf16.msra.mxu0 %v650
    %989 = vmatprep.subr.bf16.mxu0 0
    %990 = vmatpush1.bf16.msra.mxu0 %v643
    %991 = vmatprep.subr.bf16.mxu0 0
    %992 = vmatpush1.bf16.msra.mxu0 %v636
    %993 = vmatprep.subr.bf16.mxu0 0
    %994 = vmatpush2.bf16.msra.mxu0 %v741
    %995 = vmatprep.subr.bf16.mxu0 0
    %996 = vmatpush2.bf16.msra.mxu0 %v734
    %997 = vmatprep.subr.bf16.mxu0 0
    %998 = vmatpush2.bf16.msra.mxu0 %v727
    %999 = vmatprep.subr.bf16.mxu0 0
    %1000 = vmatpush2.bf16.msra.mxu0 %v720
    %1001 = vmatprep.subr.bf16.mxu0 0
    %1002 = vmatpush2.bf16.msra.mxu0 %v713
    %1003 = vmatprep.subr.bf16.mxu0 0
    %1004 = vmatpush2.bf16.msra.mxu0 %v706
    %1005 = vmatprep.subr.bf16.mxu0 0
    %1006 = vmatpush2.bf16.msra.mxu0 %v699
    %1007 = vmatprep.subr.bf16.mxu0 0
    %1008 = vmatpush2.bf16.msra.mxu0 %v692
    %1009 = vmatprep.mubr.bf16.mxu0 %v112
    %1010 = vmatmul.mubr.bf16.gmra.mxu0 %v111
    %v1011 = vpop.f32.mrf.mxu0
    %v1012 = vadd.f32 %v270, %v1011
    %v1013 = vpop.f32.mrf.mxu0
    %v1014 = vpop.f32.mrf.mxu0
    %v1015 = vpop.f32.mrf.mxu0
    %1016 = vdwg.mxu0
    %v1017 = vmax.f32 %v889, 0.0
    %v1018 = vmax.f32 %v891, 0.0
    %v1019 = vmax.f32 %v930, 0.0
    %v1020 = vmax.f32 %v932, 0.0
    %v1021 = vmax.f32 %v971, 0.0
    %v1022 = vmax.f32 %v973, 0.0
    %v1023 = vmax.f32 %v1012, 0.0
    %v1024 = vpack.c.bf16 %v1017, %v1017
    %v1025 = vpack.c.bf16 %v1018, %v1018
    %v1026 = vpack.c.bf16 %v1019, %v1019
    %v1027 = vpack.c.bf16 %v1020, %v1020
    %v1028 = vpack.c.bf16 %v1021, %v1021
    %v1029 = vpack.c.bf16 %v1022, %v1022
    %v1030 = vpack.c.bf16 %v1023, %v1023
    %v1031 = vld [vmem:[#allocation4] sm:$0xff]
    %v1032 = vld [vmem:[#allocation4 + $0x8] sm:$0xff]
    %v1033 = vld [vmem:[#allocation4 + $0x10] sm:$0xff]
    %v1034 = vld [vmem:[#allocation4 + $0x18] sm:$0xff]
    %v1035 = vld [vmem:[#allocation4 + $0x20] sm:$0xff]
    %v1036 = vld [vmem:[#allocation4 + $0x28] sm:$0xff]
    %v1037 = vld [vmem:[#allocation4 + $0x30] sm:$0xff]
    %v1038 = vld [vmem:[#allocation4 + $0x38] sm:$0xff]
    %v1039 = vld [vmem:[#allocation4 + $0x40] sm:$0xff]
    %v1040 = vld [vmem:[#allocation4 + $0x48] sm:$0xff]
    %v1041 = vld [vmem:[#allocation4 + $0x50] sm:$0xff]
    %v1042 = vld [vmem:[#allocation4 + $0x58] sm:$0xff]
    %v1043 = vld [vmem:[#allocation4 + $0x60] sm:$0xff]
    %v1044 = vld [vmem:[#allocation4 + $0x68] sm:$0xff]
    %v1045 = vld [vmem:[#allocation4 + $0x70] sm:$0xff]
    %v1046 = vld [vmem:[#allocation4 + $0x78] sm:$0xff]
    %v1047 = vld [vmem:[#allocation4 + $0x80] sm:$0xff]
    %v1048 = vld [vmem:[#allocation4 + $0x88] sm:$0xff]
    %v1049 = vld [vmem:[#allocation4 + $0x90] sm:$0xff]
    %v1050 = vld [vmem:[#allocation4 + $0x98] sm:$0xff]
    %v1051 = vld [vmem:[#allocation4 + $0xa0] sm:$0xff]
    %v1052 = vld [vmem:[#allocation4 + $0xa8] sm:$0xff]
    %v1053 = vld [vmem:[#allocation4 + $0xb0] sm:$0xff]
    %v1054 = vld [vmem:[#allocation4 + $0xb8] sm:$0xff]
    %v1055 = vld [vmem:[#allocation4 + $0xc0] sm:$0xff]
    %v1056 = vld [vmem:[#allocation4 + $0xc8] sm:$0xff]
    %v1057 = vld [vmem:[#allocation4 + $0xd0] sm:$0xff]
    %v1058 = vld [vmem:[#allocation4 + $0xd8] sm:$0xff]
    %v1059 = vld [vmem:[#allocation4 + $0xe0] sm:$0xff]
    %v1060 = vld [vmem:[#allocation4 + $0xe8] sm:$0xff]
    %v1061 = vld [vmem:[#allocation4 + $0xf0] sm:$0xff]
    %v1062 = vld [vmem:[#allocation4 + $0xf8] sm:$0xff]
    %v1063 = vld [vmem:[#allocation4 + $0x100] sm:$0xff]
    %v1064 = vld [vmem:[#allocation4 + $0x108] sm:$0xff]
    %v1065 = vld [vmem:[#allocation4 + $0x110] sm:$0xff]
    %v1066 = vld [vmem:[#allocation4 + $0x118] sm:$0xff]
    %v1067 = vld [vmem:[#allocation4 + $0x120] sm:$0xff]
    %v1068 = vld [vmem:[#allocation4 + $0x128] sm:$0xff]
    %v1069 = vld [vmem:[#allocation4 + $0x130] sm:$0xff]
    %v1070 = vld [vmem:[#allocation4 + $0x138] sm:$0xff]
    %v1071 = vld [vmem:[#allocation4 + $0x140] sm:$0xff]
    %v1072 = vld [vmem:[#allocation4 + $0x148] sm:$0xff]
    %v1073 = vld [vmem:[#allocation4 + $0x150] sm:$0xff]
    %v1074 = vld [vmem:[#allocation4 + $0x158] sm:$0xff]
    %v1075 = vld [vmem:[#allocation4 + $0x160] sm:$0xff]
    %v1076 = vld [vmem:[#allocation4 + $0x168] sm:$0xff]
    %v1077 = vld [vmem:[#allocation4 + $0x170] sm:$0xff]
    %v1078 = vld [vmem:[#allocation4 + $0x178] sm:$0xff]
    %v1079 = vld [vmem:[#allocation4 + $0x180] sm:$0xff]
    %v1080 = vld [vmem:[#allocation4 + $0x188] sm:$0xff]
    %v1081 = vld [vmem:[#allocation4 + $0x190] sm:$0xff]
    %v1082 = vld [vmem:[#allocation4 + $0x198] sm:$0xff]
    %v1083 = vld [vmem:[#allocation4 + $0x1a0] sm:$0xff]
    %v1084 = vld [vmem:[#allocation4 + $0x1a8] sm:$0xff]
    %v1085 = vld [vmem:[#allocation4 + $0x1b0] sm:$0xff]
    %v1086 = vld [vmem:[#allocation4 + $0x1b8] sm:$0xff]
    %v1087 = vld [vmem:[#allocation4 + $0x1c0] sm:$0xff]
    %v1088 = vld [vmem:[#allocation4 + $0x1c8] sm:$0xff]
    %v1089 = vld [vmem:[#allocation4 + $0x1d0] sm:$0xff]
    %v1090 = vld [vmem:[#allocation4 + $0x1d8] sm:$0xff]
    %v1091 = vld [vmem:[#allocation4 + $0x1e0] sm:$0xff]
    %v1092 = vld [vmem:[#allocation4 + $0x1e8] sm:$0xff]
    %v1093 = vld [vmem:[#allocation4 + $0x1f0] sm:$0xff]
    %v1094 = vld [vmem:[#allocation4 + $0x1f8] sm:$0xff]
    %v1095 = vld [vmem:[#allocation4 + $0x200] sm:$0xff]
    %v1096 = vld [vmem:[#allocation4 + $0x208] sm:$0xff]
    %v1097 = vld [vmem:[#allocation4 + $0x210] sm:$0xff]
    %v1098 = vld [vmem:[#allocation4 + $0x218] sm:$0xff]
    %v1099 = vld [vmem:[#allocation4 + $0x220] sm:$0xff]
    %v1100 = vld [vmem:[#allocation4 + $0x228] sm:$0xff]
    %v1101 = vld [vmem:[#allocation4 + $0x230] sm:$0xff]
    %v1102 = vld [vmem:[#allocation4 + $0x238] sm:$0xff]
    %v1103 = vld [vmem:[#allocation4 + $0x240] sm:$0xff]
    %v1104 = vld [vmem:[#allocation4 + $0x248] sm:$0xff]
    %v1105 = vld [vmem:[#allocation4 + $0x250] sm:$0xff]
    %v1106 = vld [vmem:[#allocation4 + $0x258] sm:$0xff]
    %v1107 = vld [vmem:[#allocation4 + $0x260] sm:$0xff]
    %v1108 = vld [vmem:[#allocation4 + $0x268] sm:$0xff]
    %v1109 = vld [vmem:[#allocation4 + $0x270] sm:$0xff]
    %v1110 = vld [vmem:[#allocation4 + $0x278] sm:$0xff]
    %v1111 = vld [vmem:[#allocation4 + $0x280] sm:$0xff]
    %v1112 = vld [vmem:[#allocation4 + $0x288] sm:$0xff]
    %v1113 = vld [vmem:[#allocation4 + $0x290] sm:$0xff]
    %v1114 = vld [vmem:[#allocation4 + $0x298] sm:$0xff]
    %v1115 = vld [vmem:[#allocation4 + $0x2a0] sm:$0xff]
    %v1116 = vld [vmem:[#allocation4 + $0x2a8] sm:$0xff]
    %v1117 = vld [vmem:[#allocation4 + $0x2b0] sm:$0xff]
    %v1118 = vld [vmem:[#allocation4 + $0x2b8] sm:$0xff]
    %v1119 = vld [vmem:[#allocation4 + $0x2c0] sm:$0xff]
    %v1120 = vld [vmem:[#allocation4 + $0x2c8] sm:$0xff]
    %v1121 = vld [vmem:[#allocation4 + $0x2d0] sm:$0xff]
    %v1122 = vld [vmem:[#allocation4 + $0x2d8] sm:$0xff]
    %v1123 = vld [vmem:[#allocation4 + $0x2e0] sm:$0xff]
    %v1124 = vld [vmem:[#allocation4 + $0x2e8] sm:$0xff]
    %v1125 = vld [vmem:[#allocation4 + $0x2f0] sm:$0xff]
    %v1126 = vld [vmem:[#allocation4 + $0x2f8] sm:$0xff]
    %v1127 = vld [vmem:[#allocation4 + $0x300] sm:$0xff]
    %v1128 = vld [vmem:[#allocation4 + $0x308] sm:$0xff]
    %v1129 = vld [vmem:[#allocation4 + $0x310] sm:$0xff]
    %v1130 = vld [vmem:[#allocation4 + $0x318] sm:$0xff]
    %v1131 = vld [vmem:[#allocation4 + $0x320] sm:$0xff]
    %v1132 = vld [vmem:[#allocation4 + $0x328] sm:$0xff]
    %v1133 = vld [vmem:[#allocation4 + $0x330] sm:$0xff]
    %v1134 = vld [vmem:[#allocation4 + $0x338] sm:$0xff]
    %v1135 = vld [vmem:[#allocation4 + $0x340] sm:$0xff]
    %v1136 = vld [vmem:[#allocation4 + $0x348] sm:$0xff]
    %v1137 = vld [vmem:[#allocation4 + $0x350] sm:$0xff]
    %v1138 = vld [vmem:[#allocation4 + $0x358] sm:$0xff]
    %v1139 = vld [vmem:[#allocation4 + $0x360] sm:$0xff]
    %v1140 = vld [vmem:[#allocation4 + $0x368] sm:$0xff]
    %v1141 = vld [vmem:[#allocation4 + $0x370] sm:$0xff]
    %v1142 = vld [vmem:[#allocation4 + $0x378] sm:$0xff]
    %v1143 = vld [vmem:[#allocation6] sm:$0x3]
    %v1145 = vlaneseq
    %v1146 = vshrl.u32 %v1145, 7
    %v1147 = vsub.s32 0, %v1146
    %v1148 = vrot.slane %v1143, %v1147
    %v1149 = vlaneseq
    %v1150 = vshrl.u32 %v1149, 7
    %v1151 = vsub.s32 1, %v1150
    %v1152 = vrot.slane %v1143, %v1151
    %v1267 = vunpack.c.l.b16 %v1031
    %v1268 = vunpack.c.h.b16 %v1031
    %v1269 = vunpack.c.l.b16 %v1032
    %v1270 = vunpack.c.h.b16 %v1032
    %v1271 = vunpack.c.l.b16 %v1033
    %v1272 = vunpack.c.h.b16 %v1033
    %v1273 = vunpack.c.l.b16 %v1034
    %v1274 = vunpack.c.h.b16 %v1034
    %v1275 = vunpack.c.l.b16 %v1035
    %v1276 = vunpack.c.h.b16 %v1035
    %v1277 = vunpack.c.l.b16 %v1036
    %v1278 = vunpack.c.h.b16 %v1036
    %v1279 = vunpack.c.l.b16 %v1037
    %v1280 = vunpack.c.h.b16 %v1037
    %v1281 = vunpack.c.l.b16 %v1038
    %v1282 = vunpack.c.h.b16 %v1038
    %v1283 = vunpack.c.l.b16 %v1039
    %v1284 = vunpack.c.h.b16 %v1039
    %v1285 = vunpack.c.l.b16 %v1040
    %v1286 = vunpack.c.h.b16 %v1040
    %v1287 = vunpack.c.l.b16 %v1041
    %v1288 = vunpack.c.h.b16 %v1041
    %v1289 = vunpack.c.l.b16 %v1042
    %v1290 = vunpack.c.h.b16 %v1042
    %v1291 = vunpack.c.l.b16 %v1043
    %v1292 = vunpack.c.h.b16 %v1043
    %v1293 = vunpack.c.l.b16 %v1044
    %v1294 = vunpack.c.h.b16 %v1044
    %v1295 = vunpack.c.l.b16 %v1045
    %v1296 = vunpack.c.h.b16 %v1045
    %v1297 = vunpack.c.l.b16 %v1046
    %v1298 = vunpack.c.h.b16 %v1046
    %v1299 = vunpack.c.l.b16 %v1047
    %v1300 = vunpack.c.h.b16 %v1047
    %v1301 = vunpack.c.l.b16 %v1048
    %v1302 = vunpack.c.h.b16 %v1048
    %v1303 = vunpack.c.l.b16 %v1049
    %v1304 = vunpack.c.h.b16 %v1049
    %v1305 = vunpack.c.l.b16 %v1050
    %v1306 = vunpack.c.h.b16 %v1050
    %v1307 = vunpack.c.l.b16 %v1051
    %v1308 = vunpack.c.h.b16 %v1051
    %v1309 = vunpack.c.l.b16 %v1052
    %v1310 = vunpack.c.h.b16 %v1052
    %v1311 = vunpack.c.l.b16 %v1053
    %v1312 = vunpack.c.h.b16 %v1053
    %v1313 = vunpack.c.l.b16 %v1054
    %v1314 = vunpack.c.h.b16 %v1054
    %v1315 = vunpack.c.l.b16 %v1055
    %v1316 = vunpack.c.h.b16 %v1055
    %v1317 = vunpack.c.l.b16 %v1056
    %v1318 = vunpack.c.h.b16 %v1056
    %v1319 = vunpack.c.l.b16 %v1057
    %v1320 = vunpack.c.h.b16 %v1057
    %v1321 = vunpack.c.l.b16 %v1058
    %v1322 = vunpack.c.h.b16 %v1058
    %v1323 = vunpack.c.l.b16 %v1059
    %v1324 = vunpack.c.h.b16 %v1059
    %v1325 = vunpack.c.l.b16 %v1060
    %v1326 = vunpack.c.h.b16 %v1060
    %v1327 = vunpack.c.l.b16 %v1061
    %v1328 = vunpack.c.h.b16 %v1061
    %v1329 = vunpack.c.l.b16 %v1062
    %v1330 = vunpack.c.h.b16 %v1062
    %v1331 = vunpack.c.l.b16 %v1063
    %v1332 = vunpack.c.h.b16 %v1063
    %v1333 = vunpack.c.l.b16 %v1064
    %v1334 = vunpack.c.h.b16 %v1064
    %v1335 = vunpack.c.l.b16 %v1065
    %v1336 = vunpack.c.h.b16 %v1065
    %v1337 = vunpack.c.l.b16 %v1066
    %v1338 = vunpack.c.h.b16 %v1066
    %v1339 = vunpack.c.l.b16 %v1067
    %v1340 = vunpack.c.h.b16 %v1067
    %v1341 = vunpack.c.l.b16 %v1068
    %v1342 = vunpack.c.h.b16 %v1068
    %v1343 = vunpack.c.l.b16 %v1069
    %v1344 = vunpack.c.h.b16 %v1069
    %v1345 = vunpack.c.l.b16 %v1070
    %v1346 = vunpack.c.h.b16 %v1070
    %v1347 = vunpack.c.l.b16 %v1071
    %v1348 = vunpack.c.h.b16 %v1071
    %v1349 = vunpack.c.l.b16 %v1072
    %v1350 = vunpack.c.h.b16 %v1072
    %v1351 = vunpack.c.l.b16 %v1073
    %v1352 = vunpack.c.h.b16 %v1073
    %v1353 = vunpack.c.l.b16 %v1074
    %v1354 = vunpack.c.h.b16 %v1074
    %v1355 = vunpack.c.l.b16 %v1075
    %v1356 = vunpack.c.h.b16 %v1075
    %v1357 = vunpack.c.l.b16 %v1076
    %v1358 = vunpack.c.h.b16 %v1076
    %v1359 = vunpack.c.l.b16 %v1077
    %v1360 = vunpack.c.h.b16 %v1077
    %v1361 = vunpack.c.l.b16 %v1078
    %v1362 = vunpack.c.h.b16 %v1078
    %v1363 = vunpack.c.l.b16 %v1079
    %v1364 = vunpack.c.h.b16 %v1079
    %v1365 = vunpack.c.l.b16 %v1080
    %v1366 = vunpack.c.h.b16 %v1080
    %v1367 = vunpack.c.l.b16 %v1081
    %v1368 = vunpack.c.h.b16 %v1081
    %v1369 = vunpack.c.l.b16 %v1082
    %v1370 = vunpack.c.h.b16 %v1082
    %v1371 = vunpack.c.l.b16 %v1083
    %v1372 = vunpack.c.h.b16 %v1083
    %v1373 = vunpack.c.l.b16 %v1084
    %v1374 = vunpack.c.h.b16 %v1084
    %v1375 = vunpack.c.l.b16 %v1085
    %v1376 = vunpack.c.h.b16 %v1085
    %v1377 = vunpack.c.l.b16 %v1086
    %v1378 = vunpack.c.h.b16 %v1086
    %v1379 = vunpack.c.l.b16 %v1087
    %v1380 = vunpack.c.h.b16 %v1087
    %v1381 = vunpack.c.l.b16 %v1088
    %v1382 = vunpack.c.h.b16 %v1088
    %v1383 = vunpack.c.l.b16 %v1089
    %v1384 = vunpack.c.h.b16 %v1089
    %v1385 = vunpack.c.l.b16 %v1090
    %v1386 = vunpack.c.h.b16 %v1090
    %v1387 = vunpack.c.l.b16 %v1091
    %v1388 = vunpack.c.h.b16 %v1091
    %v1389 = vunpack.c.l.b16 %v1092
    %v1390 = vunpack.c.h.b16 %v1092
    %v1391 = vunpack.c.l.b16 %v1093
    %v1392 = vunpack.c.h.b16 %v1093
    %v1393 = vunpack.c.l.b16 %v1094
    %v1394 = vunpack.c.h.b16 %v1094
    %v1395 = vunpack.c.l.b16 %v1095
    %v1396 = vunpack.c.h.b16 %v1095
    %v1397 = vunpack.c.l.b16 %v1096
    %v1398 = vunpack.c.h.b16 %v1096
    %v1399 = vunpack.c.l.b16 %v1097
    %v1400 = vunpack.c.h.b16 %v1097
    %v1401 = vunpack.c.l.b16 %v1098
    %v1402 = vunpack.c.h.b16 %v1098
    %v1403 = vunpack.c.l.b16 %v1099
    %v1404 = vunpack.c.h.b16 %v1099
    %v1405 = vunpack.c.l.b16 %v1100
    %v1406 = vunpack.c.h.b16 %v1100
    %v1407 = vunpack.c.l.b16 %v1101
    %v1408 = vunpack.c.h.b16 %v1101
    %v1409 = vunpack.c.l.b16 %v1102
    %v1410 = vunpack.c.h.b16 %v1102
    %v1411 = vunpack.c.l.b16 %v1103
    %v1412 = vunpack.c.h.b16 %v1103
    %v1413 = vunpack.c.l.b16 %v1104
    %v1414 = vunpack.c.h.b16 %v1104
    %v1415 = vunpack.c.l.b16 %v1105
    %v1416 = vunpack.c.h.b16 %v1105
    %v1417 = vunpack.c.l.b16 %v1106
    %v1418 = vunpack.c.h.b16 %v1106
    %v1419 = vunpack.c.l.b16 %v1107
    %v1420 = vunpack.c.h.b16 %v1107
    %v1421 = vunpack.c.l.b16 %v1108
    %v1422 = vunpack.c.h.b16 %v1108
    %v1423 = vunpack.c.l.b16 %v1109
    %v1424 = vunpack.c.h.b16 %v1109
    %v1425 = vunpack.c.l.b16 %v1110
    %v1426 = vunpack.c.h.b16 %v1110
    %v1427 = vunpack.c.l.b16 %v1111
    %v1428 = vunpack.c.h.b16 %v1111
    %v1429 = vunpack.c.l.b16 %v1112
    %v1430 = vunpack.c.h.b16 %v1112
    %v1431 = vunpack.c.l.b16 %v1113
    %v1432 = vunpack.c.h.b16 %v1113
    %v1433 = vunpack.c.l.b16 %v1114
    %v1434 = vunpack.c.h.b16 %v1114
    %v1435 = vunpack.c.l.b16 %v1115
    %v1436 = vunpack.c.h.b16 %v1115
    %v1437 = vunpack.c.l.b16 %v1116
    %v1438 = vunpack.c.h.b16 %v1116
    %v1439 = vunpack.c.l.b16 %v1117
    %v1440 = vunpack.c.h.b16 %v1117
    %v1441 = vunpack.c.l.b16 %v1118
    %v1442 = vunpack.c.h.b16 %v1118
    %v1443 = vunpack.c.l.b16 %v1119
    %v1444 = vunpack.c.h.b16 %v1119
    %v1445 = vunpack.c.l.b16 %v1120
    %v1446 = vunpack.c.h.b16 %v1120
    %v1447 = vunpack.c.l.b16 %v1121
    %v1448 = vunpack.c.h.b16 %v1121
    %v1449 = vunpack.c.l.b16 %v1122
    %v1450 = vunpack.c.h.b16 %v1122
    %v1451 = vunpack.c.l.b16 %v1123
    %v1452 = vunpack.c.h.b16 %v1123
    %v1453 = vunpack.c.l.b16 %v1124
    %v1454 = vunpack.c.h.b16 %v1124
    %v1455 = vunpack.c.l.b16 %v1125
    %v1456 = vunpack.c.h.b16 %v1125
    %v1457 = vunpack.c.l.b16 %v1126
    %v1458 = vunpack.c.h.b16 %v1126
    %v1459 = vunpack.c.l.b16 %v1127
    %v1460 = vunpack.c.h.b16 %v1127
    %v1461 = vunpack.c.l.b16 %v1128
    %v1462 = vunpack.c.h.b16 %v1128
    %v1463 = vunpack.c.l.b16 %v1129
    %v1464 = vunpack.c.h.b16 %v1129
    %v1465 = vunpack.c.l.b16 %v1130
    %v1466 = vunpack.c.h.b16 %v1130
    %v1467 = vunpack.c.l.b16 %v1131
    %v1468 = vunpack.c.h.b16 %v1131
    %v1469 = vunpack.c.l.b16 %v1132
    %v1470 = vunpack.c.h.b16 %v1132
    %v1471 = vunpack.c.l.b16 %v1133
    %v1472 = vunpack.c.h.b16 %v1133
    %v1473 = vunpack.c.l.b16 %v1134
    %v1474 = vunpack.c.h.b16 %v1134
    %v1475 = vunpack.c.l.b16 %v1135
    %v1476 = vunpack.c.h.b16 %v1135
    %v1477 = vunpack.c.l.b16 %v1136
    %v1478 = vunpack.c.h.b16 %v1136
    %v1479 = vunpack.c.l.b16 %v1137
    %v1480 = vunpack.c.h.b16 %v1137
    %v1481 = vunpack.c.l.b16 %v1138
    %v1482 = vunpack.c.h.b16 %v1138
    %v1483 = vunpack.c.l.b16 %v1139
    %v1484 = vunpack.c.h.b16 %v1139
    %v1485 = vunpack.c.l.b16 %v1140
    %v1486 = vunpack.c.h.b16 %v1140
    %v1487 = vunpack.c.l.b16 %v1141
    %v1488 = vunpack.c.h.b16 %v1141
    %v1489 = vunpack.c.l.b16 %v1142
    %v1490 = vunpack.c.h.b16 %v1142
    %v1491 = vpack.c.b16 %v1269, %v1267
    %v1492 = vpack.c.b16 %v1270, %v1268
    %v1493 = vpack.c.b16 %v1273, %v1271
    %v1494 = vpack.c.b16 %v1274, %v1272
    %v1495 = vpack.c.b16 %v1277, %v1275
    %v1496 = vpack.c.b16 %v1278, %v1276
    %v1497 = vpack.c.b16 %v1281, %v1279
    %v1498 = vpack.c.b16 %v1282, %v1280
    %v1499 = vpack.c.b16 %v1285, %v1283
    %v1500 = vpack.c.b16 %v1286, %v1284
    %v1501 = vpack.c.b16 %v1289, %v1287
    %v1502 = vpack.c.b16 %v1290, %v1288
    %v1503 = vpack.c.b16 %v1293, %v1291
    %v1504 = vpack.c.b16 %v1294, %v1292
    %v1505 = vpack.c.b16 %v1297, %v1295
    %v1506 = vpack.c.b16 %v1298, %v1296
    %v1507 = vpack.c.b16 %v1301, %v1299
    %v1508 = vpack.c.b16 %v1302, %v1300
    %v1509 = vpack.c.b16 %v1305, %v1303
    %v1510 = vpack.c.b16 %v1306, %v1304
    %v1511 = vpack.c.b16 %v1309, %v1307
    %v1512 = vpack.c.b16 %v1310, %v1308
    %v1513 = vpack.c.b16 %v1313, %v1311
    %v1514 = vpack.c.b16 %v1314, %v1312
    %v1515 = vpack.c.b16 %v1317, %v1315
    %v1516 = vpack.c.b16 %v1318, %v1316
    %v1517 = vpack.c.b16 %v1321, %v1319
    %v1518 = vpack.c.b16 %v1322, %v1320
    %v1519 = vpack.c.b16 %v1325, %v1323
    %v1520 = vpack.c.b16 %v1326, %v1324
    %v1521 = vpack.c.b16 %v1329, %v1327
    %v1522 = vpack.c.b16 %v1330, %v1328
    %v1523 = vpack.c.b16 %v1333, %v1331
    %v1524 = vpack.c.b16 %v1334, %v1332
    %v1525 = vpack.c.b16 %v1337, %v1335
    %v1526 = vpack.c.b16 %v1338, %v1336
    %v1527 = vpack.c.b16 %v1341, %v1339
    %v1528 = vpack.c.b16 %v1342, %v1340
    %v1529 = vpack.c.b16 %v1345, %v1343
    %v1530 = vpack.c.b16 %v1346, %v1344
    %v1531 = vpack.c.b16 %v1349, %v1347
    %v1532 = vpack.c.b16 %v1350, %v1348
    %v1533 = vpack.c.b16 %v1353, %v1351
    %v1534 = vpack.c.b16 %v1354, %v1352
    %v1535 = vpack.c.b16 %v1357, %v1355
    %v1536 = vpack.c.b16 %v1358, %v1356
    %v1537 = vpack.c.b16 %v1361, %v1359
    %v1538 = vpack.c.b16 %v1362, %v1360
    %v1539 = vpack.c.b16 %v1365, %v1363
    %v1540 = vpack.c.b16 %v1366, %v1364
    %v1541 = vpack.c.b16 %v1369, %v1367
    %v1542 = vpack.c.b16 %v1370, %v1368
    %v1543 = vpack.c.b16 %v1373, %v1371
    %v1544 = vpack.c.b16 %v1374, %v1372
    %v1545 = vpack.c.b16 %v1377, %v1375
    %v1546 = vpack.c.b16 %v1378, %v1376
    %v1547 = vpack.c.b16 %v1381, %v1379
    %v1548 = vpack.c.b16 %v1382, %v1380
    %v1549 = vpack.c.b16 %v1385, %v1383
    %v1550 = vpack.c.b16 %v1386, %v1384
    %v1551 = vpack.c.b16 %v1389, %v1387
    %v1552 = vpack.c.b16 %v1390, %v1388
    %v1553 = vpack.c.b16 %v1393, %v1391
    %v1554 = vpack.c.b16 %v1394, %v1392
    %v1555 = vpack.c.b16 %v1397, %v1395
    %v1556 = vpack.c.b16 %v1398, %v1396
    %v1557 = vpack.c.b16 %v1401, %v1399
    %v1558 = vpack.c.b16 %v1402, %v1400
    %v1559 = vpack.c.b16 %v1405, %v1403
    %v1560 = vpack.c.b16 %v1406, %v1404
    %v1561 = vpack.c.b16 %v1409, %v1407
    %v1562 = vpack.c.b16 %v1410, %v1408
    %v1563 = vpack.c.b16 %v1413, %v1411
    %v1564 = vpack.c.b16 %v1414, %v1412
    %v1565 = vpack.c.b16 %v1417, %v1415
    %v1566 = vpack.c.b16 %v1418, %v1416
    %v1567 = vpack.c.b16 %v1421, %v1419
    %v1568 = vpack.c.b16 %v1422, %v1420
    %v1569 = vpack.c.b16 %v1425, %v1423
    %v1570 = vpack.c.b16 %v1426, %v1424
    %v1571 = vpack.c.b16 %v1429, %v1427
    %v1572 = vpack.c.b16 %v1430, %v1428
    %v1573 = vpack.c.b16 %v1433, %v1431
    %v1574 = vpack.c.b16 %v1434, %v1432
    %v1575 = vpack.c.b16 %v1437, %v1435
    %v1576 = vpack.c.b16 %v1438, %v1436
    %v1577 = vpack.c.b16 %v1441, %v1439
    %v1578 = vpack.c.b16 %v1442, %v1440
    %v1579 = vpack.c.b16 %v1445, %v1443
    %v1580 = vpack.c.b16 %v1446, %v1444
    %v1581 = vpack.c.b16 %v1449, %v1447
    %v1582 = vpack.c.b16 %v1450, %v1448
    %v1583 = vpack.c.b16 %v1453, %v1451
    %v1584 = vpack.c.b16 %v1454, %v1452
    %v1585 = vpack.c.b16 %v1457, %v1455
    %v1586 = vpack.c.b16 %v1458, %v1456
    %v1587 = vpack.c.b16 %v1461, %v1459
    %v1588 = vpack.c.b16 %v1462, %v1460
    %v1589 = vpack.c.b16 %v1465, %v1463
    %v1590 = vpack.c.b16 %v1466, %v1464
    %v1591 = vpack.c.b16 %v1469, %v1467
    %v1592 = vpack.c.b16 %v1470, %v1468
    %v1593 = vpack.c.b16 %v1473, %v1471
    %v1594 = vpack.c.b16 %v1474, %v1472
    %v1595 = vpack.c.b16 %v1477, %v1475
    %v1596 = vpack.c.b16 %v1478, %v1476
    %v1597 = vpack.c.b16 %v1481, %v1479
    %v1598 = vpack.c.b16 %v1482, %v1480
    %v1599 = vpack.c.b16 %v1485, %v1483
    %v1600 = vpack.c.b16 %v1486, %v1484
    %v1601 = vpack.c.b16 %v1489, %v1487
    %v1602 = vpack.c.b16 %v1490, %v1488
    %1715 = vmatprep.subr.bf16.mxu0 %v1506
    %1716 = vmatpush1.bf16.msra.mxu0 %v1505
    %1717 = vmatprep.subr.bf16.mxu0 %v1504
    %1718 = vmatpush1.bf16.msra.mxu0 %v1503
    %1719 = vmatprep.subr.bf16.mxu0 %v1502
    %1720 = vmatpush1.bf16.msra.mxu0 %v1501
    %1721 = vmatprep.subr.bf16.mxu0 %v1500
    %1722 = vmatpush1.bf16.msra.mxu0 %v1499
    %1723 = vmatprep.subr.bf16.mxu0 %v1498
    %1724 = vmatpush1.bf16.msra.mxu0 %v1497
    %1725 = vmatprep.subr.bf16.mxu0 %v1496
    %1726 = vmatpush1.bf16.msra.mxu0 %v1495
    %1727 = vmatprep.subr.bf16.mxu0 %v1494
    %1728 = vmatpush1.bf16.msra.mxu0 %v1493
    %1729 = vmatprep.subr.bf16.mxu0 %v1492
    %1730 = vmatpush1.bf16.msra.mxu0 %v1491
    %1731 = vmatprep.subr.bf16.mxu0 %v1522
    %1732 = vmatpush2.bf16.msra.mxu0 %v1521
    %1733 = vmatprep.subr.bf16.mxu0 %v1520
    %1734 = vmatpush2.bf16.msra.mxu0 %v1519
    %1735 = vmatprep.subr.bf16.mxu0 %v1518
    %1736 = vmatpush2.bf16.msra.mxu0 %v1517
    %1737 = vmatprep.subr.bf16.mxu0 %v1516
    %1738 = vmatpush2.bf16.msra.mxu0 %v1515
    %1739 = vmatprep.subr.bf16.mxu0 %v1514
    %1740 = vmatpush2.bf16.msra.mxu0 %v1513
    %1741 = vmatprep.subr.bf16.mxu0 %v1512
    %1742 = vmatpush2.bf16.msra.mxu0 %v1511
    %1743 = vmatprep.subr.bf16.mxu0 %v1510
    %1744 = vmatpush2.bf16.msra.mxu0 %v1509
    %1745 = vmatprep.subr.bf16.mxu0 %v1508
    %1746 = vmatpush2.bf16.msra.mxu0 %v1507
    %1747 = vmatprep.mubr.bf16.mxu0 %v1025
    %1748 = vmatmul.mubr.bf16.gmra.mxu0 %v1024
    %v1749 = vpop.f32.mrf.mxu0
    %v1750 = vadd.f32 %v1148, %v1749
    %v1751 = vpop.f32.mrf.mxu0
    %v1752 = vadd.f32 %v1152, %v1751
    %v1753 = vpop.f32.mrf.mxu0
    %v1754 = vpop.f32.mrf.mxu0
    %1755 = vdwg.mxu0
    %1756 = vmatprep.subr.bf16.mxu0 %v1538
    %1757 = vmatpush1.bf16.msra.mxu0 %v1537
    %1758 = vmatprep.subr.bf16.mxu0 %v1536
    %1759 = vmatpush1.bf16.msra.mxu0 %v1535
    %1760 = vmatprep.subr.bf16.mxu0 %v1534
    %1761 = vmatpush1.bf16.msra.mxu0 %v1533
    %1762 = vmatprep.subr.bf16.mxu0 %v1532
    %1763 = vmatpush1.bf16.msra.mxu0 %v1531
    %1764 = vmatprep.subr.bf16.mxu0 %v1530
    %1765 = vmatpush1.bf16.msra.mxu0 %v1529
    %1766 = vmatprep.subr.bf16.mxu0 %v1528
    %1767 = vmatpush1.bf16.msra.mxu0 %v1527
    %1768 = vmatprep.subr.bf16.mxu0 %v1526
    %1769 = vmatpush1.bf16.msra.mxu0 %v1525
    %1770 = vmatprep.subr.bf16.mxu0 %v1524
    %1771 = vmatpush1.bf16.msra.mxu0 %v1523
    %1772 = vmatprep.subr.bf16.mxu0 %v1554
    %1773 = vmatpush2.bf16.msra.mxu0 %v1553
    %1774 = vmatprep.subr.bf16.mxu0 %v1552
    %1775 = vmatpush2.bf16.msra.mxu0 %v1551
    %1776 = vmatprep.subr.bf16.mxu0 %v1550
    %1777 = vmatpush2.bf16.msra.mxu0 %v1549
    %1778 = vmatprep.subr.bf16.mxu0 %v1548
    %1779 = vmatpush2.bf16.msra.mxu0 %v1547
    %1780 = vmatprep.subr.bf16.mxu0 %v1546
    %1781 = vmatpush2.bf16.msra.mxu0 %v1545
    %1782 = vmatprep.subr.bf16.mxu0 %v1544
    %1783 = vmatpush2.bf16.msra.mxu0 %v1543
    %1784 = vmatprep.subr.bf16.mxu0 %v1542
    %1785 = vmatpush2.bf16.msra.mxu0 %v1541
    %1786 = vmatprep.subr.bf16.mxu0 %v1540
    %1787 = vmatpush2.bf16.msra.mxu0 %v1539
    %1788 = vmatprep.mubr.bf16.mxu0 %v1027
    %1789 = vmatmul.mubr.bf16.gmra.mxu0 %v1026
    %v1790 = vpop.f32.mrf.mxu0
    %v1791 = vadd.f32 %v1750, %v1790
    %v1792 = vpop.f32.mrf.mxu0
    %v1793 = vadd.f32 %v1752, %v1792
    %v1794 = vpop.f32.mrf.mxu0
    %v1795 = vpop.f32.mrf.mxu0
    %1796 = vdwg.mxu0
    %1797 = vmatprep.subr.bf16.mxu0 %v1570
    %1798 = vmatpush1.bf16.msra.mxu0 %v1569
    %1799 = vmatprep.subr.bf16.mxu0 %v1568
    %1800 = vmatpush1.bf16.msra.mxu0 %v1567
    %1801 = vmatprep.subr.bf16.mxu0 %v1566
    %1802 = vmatpush1.bf16.msra.mxu0 %v1565
    %1803 = vmatprep.subr.bf16.mxu0 %v1564
    %1804 = vmatpush1.bf16.msra.mxu0 %v1563
    %1805 = vmatprep.subr.bf16.mxu0 %v1562
    %1806 = vmatpush1.bf16.msra.mxu0 %v1561
    %1807 = vmatprep.subr.bf16.mxu0 %v1560
    %1808 = vmatpush1.bf16.msra.mxu0 %v1559
    %1809 = vmatprep.subr.bf16.mxu0 %v1558
    %1810 = vmatpush1.bf16.msra.mxu0 %v1557
    %1811 = vmatprep.subr.bf16.mxu0 %v1556
    %1812 = vmatpush1.bf16.msra.mxu0 %v1555
    %1813 = vmatprep.subr.bf16.mxu0 %v1586
    %1814 = vmatpush2.bf16.msra.mxu0 %v1585
    %1815 = vmatprep.subr.bf16.mxu0 %v1584
    %1816 = vmatpush2.bf16.msra.mxu0 %v1583
    %1817 = vmatprep.subr.bf16.mxu0 %v1582
    %1818 = vmatpush2.bf16.msra.mxu0 %v1581
    %1819 = vmatprep.subr.bf16.mxu0 %v1580
    %1820 = vmatpush2.bf16.msra.mxu0 %v1579
    %1821 = vmatprep.subr.bf16.mxu0 %v1578
    %1822 = vmatpush2.bf16.msra.mxu0 %v1577
    %1823 = vmatprep.subr.bf16.mxu0 %v1576
    %1824 = vmatpush2.bf16.msra.mxu0 %v1575
    %1825 = vmatprep.subr.bf16.mxu0 %v1574
    %1826 = vmatpush2.bf16.msra.mxu0 %v1573
    %1827 = vmatprep.subr.bf16.mxu0 %v1572
    %1828 = vmatpush2.bf16.msra.mxu0 %v1571
    %1829 = vmatprep.mubr.bf16.mxu0 %v1029
    %1830 = vmatmul.mubr.bf16.gmra.mxu0 %v1028
    %v1831 = vpop.f32.mrf.mxu0
    %v1832 = vadd.f32 %v1791, %v1831
    %v1833 = vpop.f32.mrf.mxu0
    %v1834 = vadd.f32 %v1793, %v1833
    %v1835 = vpop.f32.mrf.mxu0
    %v1836 = vpop.f32.mrf.mxu0
    %1837 = vdwg.mxu0
    %1838 = vmatprep.subr.bf16.mxu0 %v1602
    %1839 = vmatpush1.bf16.msra.mxu0 %v1601
    %1840 = vmatprep.subr.bf16.mxu0 %v1600
    %1841 = vmatpush1.bf16.msra.mxu0 %v1599
    %1842 = vmatprep.subr.bf16.mxu0 %v1598
    %1843 = vmatpush1.bf16.msra.mxu0 %v1597
    %1844 = vmatprep.subr.bf16.mxu0 %v1596
    %1845 = vmatpush1.bf16.msra.mxu0 %v1595
    %1846 = vmatprep.subr.bf16.mxu0 %v1594
    %1847 = vmatpush1.bf16.msra.mxu0 %v1593
    %1848 = vmatprep.subr.bf16.mxu0 %v1592
    %1849 = vmatpush1.bf16.msra.mxu0 %v1591
    %1850 = vmatprep.subr.bf16.mxu0 %v1590
    %1851 = vmatpush1.bf16.msra.mxu0 %v1589
    %1852 = vmatprep.subr.bf16.mxu0 %v1588
    %1853 = vmatpush1.bf16.msra.mxu0 %v1587
    %1854 = vmatprep.subr.bf16.mxu0 0
    %1855 = vmatpush2.bf16.msra.mxu0 0
    %1856 = vmatprep.subr.bf16.mxu0 0
    %1857 = vmatpush2.bf16.msra.mxu0 0
    %1858 = vmatprep.subr.bf16.mxu0 0
    %1859 = vmatpush2.bf16.msra.mxu0 0
    %1860 = vmatprep.subr.bf16.mxu0 0
    %1861 = vmatpush2.bf16.msra.mxu0 0
    %1862 = vmatprep.subr.bf16.mxu0 0
    %1863 = vmatpush2.bf16.msra.mxu0 0
    %1864 = vmatprep.subr.bf16.mxu0 0
    %1865 = vmatpush2.bf16.msra.mxu0 0
    %1866 = vmatprep.subr.bf16.mxu0 0
    %1867 = vmatpush2.bf16.msra.mxu0 0
    %1868 = vmatprep.subr.bf16.mxu0 0
    %1869 = vmatpush2.bf16.msra.mxu0 0
    %1870 = vmatprep.mubr.bf16.mxu0 0
    %1871 = vmatmul.mubr.bf16.gmra.mxu0 %v1030
    %v1872 = vpop.f32.mrf.mxu0
    %v1873 = vadd.f32 %v1832, %v1872
    %v1874 = vpop.f32.mrf.mxu0
    %v1875 = vadd.f32 %v1834, %v1874
    %v1876 = vpop.f32.mrf.mxu0
    %v1877 = vpop.f32.mrf.mxu0
    %1878 = vdwg.mxu0
    %v1879 = vmax.f32 %v1873, 0.0
    %v1880 = vmax.f32 %v1875, 0.0
    %v1881 = vpack.c.bf16 %v1879, %v1879
    %v1882 = vpack.c.bf16 %v1880, %v1880
    %v1883 = vld [vmem:[#allocation7] sm:$0xf]
    %v1884 = vld [vmem:[#allocation7 + $0x4] sm:$0xf]
    %v1885 = vld [vmem:[#allocation7 + $0x8] sm:$0xf]
    %v1886 = vld [vmem:[#allocation7 + $0xc] sm:$0xf]
    %v1887 = vld [vmem:[#allocation7 + $0x10] sm:$0xf]
    %v1888 = vld [vmem:[#allocation7 + $0x14] sm:$0xf]
    %v1889 = vld [vmem:[#allocation7 + $0x18] sm:$0xf]
    %v1890 = vld [vmem:[#allocation7 + $0x1c] sm:$0xf]
    %v1891 = vld [vmem:[#allocation7 + $0x20] sm:$0xf]
    %v1892 = vld [vmem:[#allocation7 + $0x24] sm:$0xf]
    %v1893 = vld [vmem:[#allocation7 + $0x28] sm:$0xf]
    %v1894 = vld [vmem:[#allocation7 + $0x2c] sm:$0xf]
    %v1895 = vld [vmem:[#allocation7 + $0x30] sm:$0xf]
    %v1896 = vld [vmem:[#allocation7 + $0x34] sm:$0xf]
    %v1897 = vld [vmem:[#allocation7 + $0x38] sm:$0xf]
    %v1898 = vld [vmem:[#allocation7 + $0x3c] sm:$0xf]
    %v1899 = vld [vmem:[#allocation7 + $0x40] sm:$0xf]
    %v1900 = vld [vmem:[#allocation7 + $0x44] sm:$0xf]
    %v1901 = vld [vmem:[#allocation7 + $0x48] sm:$0xf]
    %v1902 = vld [vmem:[#allocation7 + $0x4c] sm:$0xf]
    %v1903 = vld [vmem:[#allocation7 + $0x50] sm:$0xf]
    %v1904 = vld [vmem:[#allocation7 + $0x54] sm:$0xf]
    %v1905 = vld [vmem:[#allocation7 + $0x58] sm:$0xf]
    %v1906 = vld [vmem:[#allocation7 + $0x5c] sm:$0xf]
    %v1907 = vld [vmem:[#allocation7 + $0x60] sm:$0xf]
    %v1908 = vld [vmem:[#allocation7 + $0x64] sm:$0xf]
    %v1909 = vld [vmem:[#allocation7 + $0x68] sm:$0xf]
    %v1910 = vld [vmem:[#allocation7 + $0x6c] sm:$0xf]
    %v1911 = vld [vmem:[#allocation7 + $0x70] sm:$0xf]
    %v1912 = vld [vmem:[#allocation7 + $0x74] sm:$0xf]
    %v1913 = vld [vmem:[#allocation7 + $0x78] sm:$0xf]
    %v1914 = vld [vmem:[#allocation7 + $0x7c] sm:$0xf]
    %v1915 = vld [vmem:[#allocation9] sm:$0x1]
    %v1917 = vlaneseq
    %v1918 = vshrl.u32 %v1917, 7
    %v1919 = vsub.s32 0, %v1918
    %v1920 = vrot.slane %v1915, %v1919
    %v1954 = vunpack.c.l.b16 %v1883
    %v1955 = vunpack.c.l.b16 %v1884
    %v1956 = vunpack.c.l.b16 %v1885
    %v1957 = vunpack.c.l.b16 %v1886
    %v1958 = vunpack.c.l.b16 %v1887
    %v1959 = vunpack.c.l.b16 %v1888
    %v1960 = vunpack.c.l.b16 %v1889
    %v1961 = vunpack.c.l.b16 %v1890
    %v1962 = vunpack.c.l.b16 %v1891
    %v1963 = vunpack.c.l.b16 %v1892
    %v1964 = vunpack.c.l.b16 %v1893
    %v1965 = vunpack.c.l.b16 %v1894
    %v1966 = vunpack.c.l.b16 %v1895
    %v1967 = vunpack.c.l.b16 %v1896
    %v1968 = vunpack.c.l.b16 %v1897
    %v1969 = vunpack.c.l.b16 %v1898
    %v1970 = vunpack.c.l.b16 %v1899
    %v1971 = vunpack.c.l.b16 %v1900
    %v1972 = vunpack.c.l.b16 %v1901
    %v1973 = vunpack.c.l.b16 %v1902
    %v1974 = vunpack.c.l.b16 %v1903
    %v1975 = vunpack.c.l.b16 %v1904
    %v1976 = vunpack.c.l.b16 %v1905
    %v1977 = vunpack.c.l.b16 %v1906
    %v1978 = vunpack.c.l.b16 %v1907
    %v1979 = vunpack.c.l.b16 %v1908
    %v1980 = vunpack.c.l.b16 %v1909
    %v1981 = vunpack.c.l.b16 %v1910
    %v1982 = vunpack.c.l.b16 %v1911
    %v1983 = vunpack.c.l.b16 %v1912
    %v1984 = vunpack.c.l.b16 %v1913
    %v1985 = vunpack.c.l.b16 %v1914
    %v1986 = vpack.c.b16 %v1955, %v1954
    %v1987 = vpack.c.b16 %v1957, %v1956
    %v1988 = vpack.c.b16 %v1959, %v1958
    %v1989 = vpack.c.b16 %v1961, %v1960
    %v1990 = vpack.c.b16 %v1963, %v1962
    %v1991 = vpack.c.b16 %v1965, %v1964
    %v1992 = vpack.c.b16 %v1967, %v1966
    %v1993 = vpack.c.b16 %v1969, %v1968
    %v1994 = vpack.c.b16 %v1971, %v1970
    %v1995 = vpack.c.b16 %v1973, %v1972
    %v1996 = vpack.c.b16 %v1975, %v1974
    %v1997 = vpack.c.b16 %v1977, %v1976
    %v1998 = vpack.c.b16 %v1979, %v1978
    %v1999 = vpack.c.b16 %v1981, %v1980
    %v2000 = vpack.c.b16 %v1983, %v1982
    %v2001 = vpack.c.b16 %v1985, %v1984
    %2018 = vmatprep.subr.bf16.mxu0 0
    %2019 = vmatpush1.bf16.msra.mxu0 %v1993
    %2020 = vmatprep.subr.bf16.mxu0 0
    %2021 = vmatpush1.bf16.msra.mxu0 %v1992
    %2022 = vmatprep.subr.bf16.mxu0 0
    %2023 = vmatpush1.bf16.msra.mxu0 %v1991
    %2024 = vmatprep.subr.bf16.mxu0 0
    %2025 = vmatpush1.bf16.msra.mxu0 %v1990
    %2026 = vmatprep.subr.bf16.mxu0 0
    %2027 = vmatpush1.bf16.msra.mxu0 %v1989
    %2028 = vmatprep.subr.bf16.mxu0 0
    %2029 = vmatpush1.bf16.msra.mxu0 %v1988
    %2030 = vmatprep.subr.bf16.mxu0 0
    %2031 = vmatpush1.bf16.msra.mxu0 %v1987
    %2032 = vmatprep.subr.bf16.mxu0 0
    %2033 = vmatpush1.bf16.msra.mxu0 %v1986
    %2034 = vmatprep.subr.bf16.mxu0 0
    %2035 = vmatpush2.bf16.msra.mxu0 %v2001
    %2036 = vmatprep.subr.bf16.mxu0 0
    %2037 = vmatpush2.bf16.msra.mxu0 %v2000
    %2038 = vmatprep.subr.bf16.mxu0 0
    %2039 = vmatpush2.bf16.msra.mxu0 %v1999
    %2040 = vmatprep.subr.bf16.mxu0 0
    %2041 = vmatpush2.bf16.msra.mxu0 %v1998
    %2042 = vmatprep.subr.bf16.mxu0 0
    %2043 = vmatpush2.bf16.msra.mxu0 %v1997
    %2044 = vmatprep.subr.bf16.mxu0 0
    %2045 = vmatpush2.bf16.msra.mxu0 %v1996
    %2046 = vmatprep.subr.bf16.mxu0 0
    %2047 = vmatpush2.bf16.msra.mxu0 %v1995
    %2048 = vmatprep.subr.bf16.mxu0 0
    %2049 = vmatpush2.bf16.msra.mxu0 %v1994
    %2050 = vmatprep.mubr.bf16.mxu0 %v1882
    %2051 = vmatmul.mubr.bf16.gmra.mxu0 %v1881
    %v2052 = vpop.f32.mrf.mxu0
    %v2053 = vadd.f32 %v1920, %v2052
    %v2054 = vpop.f32.mrf.mxu0
    %v2055 = vpop.f32.mrf.mxu0
    %v2056 = vpop.f32.mrf.mxu0
    %2057 = vdwg.mxu0
    %v2058 = vmax.f32 %v2053, 0.0
    %v2059 = vpack.c.bf16 %v2058, %v2058
    %v2060 = vld [vmem:[%s7] sm:$0xf]
    %v2061 = vld [vmem:[%s7 + $0x4] sm:$0xf]
    %v2062 = vld [vmem:[%s7 + $0x8] sm:$0xf]
    %v2063 = vld [vmem:[%s7 + $0xc] sm:$0xf]
    %v2064 = vld [vmem:[%s7 + $0x10] sm:$0xf]
    %v2065 = vld [vmem:[%s7 + $0x14] sm:$0xf]
    %v2066 = vld [vmem:[%s7 + $0x18] sm:$0xf]
    %v2067 = vld [vmem:[%s7 + $0x1c] sm:$0xf]
    %v2068 = vld [vmem:[%s7 + $0x20] sm:$0xf]
    %v2069 = vld [vmem:[%s7 + $0x24] sm:$0xf]
    %v2070 = vld [vmem:[%s7 + $0x28] sm:$0xf]
    %v2071 = vld [vmem:[%s7 + $0x2c] sm:$0xf]
    %v2072 = vld [vmem:[%s7 + $0x30] sm:$0xf]
    %v2073 = vld [vmem:[%s7 + $0x34] sm:$0xf]
    %v2074 = vld [vmem:[%s7 + $0x38] sm:$0xf]
    %v2075 = vld [vmem:[%s7 + $0x3c] sm:$0xf]
    %v2076 = vld [vmem:[#allocation10] sm:$0x1]
    %v2078 = vlaneseq
    %v2079 = vshrl.u32 %v2078, 7
    %v2080 = vsub.s32 0, %v2079
    %v2081 = vrot.slane %v2076, %v2080
    %v2099 = vunpack.c.l.b16 %v2060
    %v2100 = vunpack.c.l.b16 %v2061
    %v2101 = vunpack.c.l.b16 %v2062
    %v2102 = vunpack.c.l.b16 %v2063
    %v2103 = vunpack.c.l.b16 %v2064
    %v2104 = vunpack.c.l.b16 %v2065
    %v2105 = vunpack.c.l.b16 %v2066
    %v2106 = vunpack.c.l.b16 %v2067
    %v2107 = vunpack.c.l.b16 %v2068
    %v2108 = vunpack.c.l.b16 %v2069
    %v2109 = vunpack.c.l.b16 %v2070
    %v2110 = vunpack.c.l.b16 %v2071
    %v2111 = vunpack.c.l.b16 %v2072
    %v2112 = vunpack.c.l.b16 %v2073
    %v2113 = vunpack.c.l.b16 %v2074
    %v2114 = vunpack.c.l.b16 %v2075
    %v2115 = vpack.c.b16 %v2100, %v2099
    %v2116 = vpack.c.b16 %v2102, %v2101
    %v2117 = vpack.c.b16 %v2104, %v2103
    %v2118 = vpack.c.b16 %v2106, %v2105
    %v2119 = vpack.c.b16 %v2108, %v2107
    %v2120 = vpack.c.b16 %v2110, %v2109
    %v2121 = vpack.c.b16 %v2112, %v2111
    %v2122 = vpack.c.b16 %v2114, %v2113
    %2131 = vmatprep.subr.bf16.mxu0 0
    %2132 = vmatpush1.bf16.msra.mxu0 %v2122
    %2133 = vmatprep.subr.bf16.mxu0 0
    %2134 = vmatpush1.bf16.msra.mxu0 %v2121
    %2135 = vmatprep.subr.bf16.mxu0 0
    %2136 = vmatpush1.bf16.msra.mxu0 %v2120
    %2137 = vmatprep.subr.bf16.mxu0 0
    %2138 = vmatpush1.bf16.msra.mxu0 %v2119
    %2139 = vmatprep.subr.bf16.mxu0 0
    %2140 = vmatpush1.bf16.msra.mxu0 %v2118
    %2141 = vmatprep.subr.bf16.mxu0 0
    %2142 = vmatpush1.bf16.msra.mxu0 %v2117
    %2143 = vmatprep.subr.bf16.mxu0 0
    %2144 = vmatpush1.bf16.msra.mxu0 %v2116
    %2145 = vmatprep.subr.bf16.mxu0 0
    %2146 = vmatpush1.bf16.msra.mxu0 %v2115
    %2147 = vmatprep.subr.bf16.mxu0 0
    %2148 = vmatpush2.bf16.msra.mxu0 0
    %2149 = vmatprep.subr.bf16.mxu0 0
    %2150 = vmatpush2.bf16.msra.mxu0 0
    %2151 = vmatprep.subr.bf16.mxu0 0
    %2152 = vmatpush2.bf16.msra.mxu0 0
    %2153 = vmatprep.subr.bf16.mxu0 0
    %2154 = vmatpush2.bf16.msra.mxu0 0
    %2155 = vmatprep.subr.bf16.mxu0 0
    %2156 = vmatpush2.bf16.msra.mxu0 0
    %2157 = vmatprep.subr.bf16.mxu0 0
    %2158 = vmatpush2.bf16.msra.mxu0 0
    %2159 = vmatprep.subr.bf16.mxu0 0
    %2160 = vmatpush2.bf16.msra.mxu0 0
    %2161 = vmatprep.subr.bf16.mxu0 0
    %2162 = vmatpush2.bf16.msra.mxu0 0
    %2163 = vmatprep.mubr.bf16.mxu0 0
    %2164 = vmatmul.mubr.bf16.gmra.mxu0 %v2059
    %v2165 = vpop.f32.mrf.mxu0
    %v2166 = vadd.f32 %v2081, %v2165
    %v2167 = vpop.f32.mrf.mxu0
    %v2168 = vpop.f32.mrf.mxu0
    %v2169 = vpop.f32.mrf.mxu0
    %2170 = vdwg.mxu0
    %2171 = vst [vmem:[%s9] sm:$0xff] %v2166
    // Predicated region
    $region62: #{simple_cnn_forward.1} parent=1 // pred_check
      _
    $region63: #{simple_cnn_forward.1} parent=1 // pred_check_branch
      %2173 = sbr.rel (0) target = $region65
    $region64: #{simple_cnn_forward.1} parent=1 // pred_region
      _
    $region65: #{simple_cnn_forward.1} parent=1 // pred_fallthru
      _
    // Predicated region
    $region66: #{simple_cnn_forward.1} parent=1 // pred_check
      _
    $region67: #{simple_cnn_forward.1} parent=1 // pred_check_branch
      %2175 = sbr.rel (0) target = $region69
    $region68: #{simple_cnn_forward.1} parent=1 // pred_region
      _
    $region69: #{simple_cnn_forward.1} parent=1 // pred_fallthru
      _
    %2176 = vsyncpa [#allocation3], 1
    %2177 = vsyncpa [#allocation5], 1
    %2178 = vsyncpa [#allocation8], 1
    %2179 = vsyncpa [#allocation11], 1

</llo_original>
